<compile_context>
chip_gen: v7x
topology: tpu7x:2x2x1
jax: 0.10.0
libtpu: 0.0.40
codegen_flags: <defaults>
</compile_context>

<pallas_src>
import functools

import jax
import jax.numpy as jnp
from jax.experimental import pallas as pl
from jax.experimental.pallas import tpu as pltpu


def _round_up(n, m):
    return (n + m - 1) // m * m


# ---------------------------------------------------------------------------
# Fused kernel: the whole stack of TemporalBlocks for Bt batch rows.
# ---------------------------------------------------------------------------
def _tcn_fused_kernel(*refs, k, L, C, Bt, dilations, has_downs):
    """refs = inputs..., out_ref, scratch...

    inputs : x_ref (Bt, C, L) f32, then per layer
             [w1s (C,(k-1)C) bf16 if k>1], w1l (C,C) bf16, b1 (C,1) f32,
             [w2s if k>1],               w2l,            b2,
             [wd (C,C) bf16, bd (C,1) f32   if has_down],
             alphas (3*n_layers,) f32 in SMEM (PReLU slopes).
    out    : (Bt, C, L) f32
    scratch: act_ref (C, L) f32 (resident activation),
             xs_ref ((k-1)*C, L) bf16 (stacked shifted taps, if k>1).
    """
    n_layers = len(has_downs)
    it = iter(refs)
    x_ref = next(it)
    layer_refs = []
    for hd in has_downs:
        w1s = next(it) if k > 1 else None
        w1l = next(it)
        b1 = next(it)
        w2s = next(it) if k > 1 else None
        w2l = next(it)
        b2 = next(it)
        wd = next(it) if hd else None
        bd = next(it) if hd else None
        layer_refs.append((w1s, w1l, b1, w2s, w2l, b2, wd, bd))
    alphas_ref = next(it)
    out_ref = next(it)
    act_ref = next(it)
    xs_ref = next(it) if k > 1 else None
    assert next(it, None) is None

    bf16 = jnp.bfloat16
    f32 = jnp.float32

    def causal_conv(w_s, w_l, b_ref, src_f32, dilation):
        """Dilated causal conv (= Conv1d(padding=(k-1)d) + Chomp1d) as MXU matmuls."""
        if k > 1:
            # Build the (k-1) shifted taps with an XLU lane roll + mask so every
            # scratch store is a full-width, lane-aligned (unmasked) store.
            lane = jax.lax.broadcasted_iota(jnp.int32, (C, L), 1)
            for j in range(k - 1):
                shift = (k - 1 - j) * dilation      # static python int, >= dilation
                rows = pl.ds(j * C, C)
                if shift >= L:
                    xs_ref[rows, :] = jnp.zeros((C, L), bf16)
                else:
                    rolled = pltpu.roll(src_f32, shift, axis=1)
                    shifted = jnp.where(lane >= shift, rolled, 0.0)  # causal zero pad
                    xs_ref[rows, :] = shifted.astype(bf16)
            acc = jnp.dot(w_s[...], xs_ref[...], preferred_element_type=f32)
            acc = acc + jnp.dot(w_l[...], src_f32.astype(bf16),
                                preferred_element_type=f32)
        else:
            acc = jnp.dot(w_l[...], src_f32.astype(bf16), preferred_element_type=f32)
        return acc + b_ref[...]

    for bi in range(Bt):
        act_ref[...] = x_ref[bi]                     # activation resident in VMEM
        for li, (w1s, w1l, b1, w2s, w2l, b2, wd, bd) in enumerate(layer_refs):
            d = dilations[li]
            a1 = alphas_ref[3 * li + 0]
            a2 = alphas_ref[3 * li + 1]
            a3 = alphas_ref[3 * li + 2]

            acc1 = causal_conv(w1s, w1l, b1, act_ref[...], d)
            h1 = jnp.where(acc1 > 0, acc1, a1 * acc1)           # PReLU 1
            # TODO(synk): dropout1 = inference-mode identity (no RNG).

            acc2 = causal_conv(w2s, w2l, b2, h1, d)
            h2 = jnp.where(acc2 > 0, acc2, a2 * acc2)           # PReLU 2
            # TODO(synk): dropout2 = inference-mode identity (no RNG).

            # Residual: re-read the VMEM-resident input (do NOT hold the f32
            # input live across both convs -> avoids vreg spills at large L).
            if has_downs[li]:
                res = jnp.dot(wd[...], act_ref[...].astype(bf16),
                              preferred_element_type=f32) + bd[...]
            else:
                res = act_ref[...]
            y = h2 + res
            y = jnp.where(y > 0, y, a3 * y)                     # final PReLU

            if li == n_layers - 1:
                out_ref[bi] = y.astype(out_ref.dtype)
            else:
                act_ref[...] = y                                # feeds next block


def _vmem_limit_bytes(Bt, C, Lp, k):
    """Derive the scoped-VMEM request from the actual tile shapes (+ headroom)."""
    io = 2 * Bt * C * Lp * 4 * 2                     # double-buffered f32 in + out blocks
    scratch = C * Lp * 4 + max(k - 1, 0) * C * Lp * 2  # act (f32) + stacked taps (bf16)
    live = 6 * C * Lp * 4                            # f32 intermediates (acc/h/res/y)
    weights = 2 * 1024 * 1024                        # all layers' weights are tiny
    total = io + scratch + live + weights
    return int(min(max(total, 16 * 1024 * 1024), 96 * 1024 * 1024))


def temporal_conv_net(x, params, *, kernel_size):
    """Full TCN forward: one fused pallas_call over the whole stack of blocks."""
    k = kernel_size
    B, Cin, L = x.shape
    C = params["C"]
    Lp = _round_up(L, 128)
    dilations = params["dilations"]
    has_downs = params["has_downs"]

    # Pad channels (zero weight rows/cols keep extra channels exactly zero) and
    # L (causal convs never look right, so padded lanes never touch lanes < L).
    xp = jnp.pad(x.astype(jnp.float32), ((0, 0), (0, C - Cin), (0, Lp - L)))

    # Pack Bt batch rows per grid step when L is small so the MXU sees a wider N
    # and the per-grid-step overhead amortizes; Bt must divide B.
    Bt = max(1, min(8, 2048 // Lp))
    while B % Bt:
        Bt -= 1
    grid = (B // Bt,)

    weight_args = params["weights"]
    in_specs = [pl.BlockSpec((Bt, C, Lp), lambda b: (b, 0, 0))]          # x
    in_specs += [pl.BlockSpec(w.shape, lambda b: (0, 0)) for w in weight_args]
    in_specs.append(pl.BlockSpec(memory_space=pltpu.MemorySpace.SMEM))   # PReLU slopes

    scratch_shapes = [pltpu.VMEM((C, Lp), jnp.float32)]                  # resident activation
    if k > 1:
        scratch_shapes.append(pltpu.VMEM(((k - 1) * C, Lp), jnp.bfloat16))  # shifted taps

    kernel = functools.partial(
        _tcn_fused_kernel, k=k, L=Lp, C=C, Bt=Bt,
        dilations=dilations, has_downs=has_downs)

    out = pl.pallas_call(
        kernel,
        out_shape=jax.ShapeDtypeStruct((B, C, Lp), jnp.float32),
        grid_spec=pltpu.PrefetchScalarGridSpec(
            num_scalar_prefetch=0,
            grid=grid,
            in_specs=in_specs,
            out_specs=pl.BlockSpec((Bt, C, Lp), lambda b: (b, 0, 0)),
            scratch_shapes=scratch_shapes,
        ),
        compiler_params=pltpu.CompilerParams(
            dimension_semantics=("parallel",),          # batch groups independent
            vmem_limit_bytes=_vmem_limit_bytes(Bt, C, Lp, k),
        ),
    )(xp, *weight_args, params["alphas"])

    return out[:, :params["cout_last"], :L]


# ---------------------------------------------------------------------------
# Deterministic parameter construction (glue, plain JAX).
# ---------------------------------------------------------------------------
def _fold_weight_norm(v, g):
    """PyTorch weight_norm(dim=0): W = g * v / ||v|| (norm over non-output dims)."""
    norm = jnp.sqrt(jnp.sum(v * v, axis=tuple(range(1, v.ndim)), keepdims=True))
    return g * v / norm


def _split_taps(w, C):
    """(cout, cin, k) f32 -> (w_shift (C,(k-1)C), w_last (C,C)) bf16.

    Tap j multiplies x shifted right by (k-1-j)*d; taps 0..k-2 are stacked on the
    contraction dim (matching the kernel's xs scratch), tap k-1 (shift 0) is kept
    separate so the kernel can apply it directly to the unshifted activation.
    """
    cout, cin, k = w.shape
    wp = jnp.zeros((C, C, k), jnp.float32).at[:cout, :cin, :].set(w)
    wt = jnp.transpose(wp, (0, 2, 1))                         # (C, k, C)
    w_shift = wt[:, :k - 1, :].reshape(C, (k - 1) * C).astype(jnp.bfloat16)
    w_last = wt[:, k - 1, :].astype(jnp.bfloat16)
    return w_shift, w_last


def _pad_bias(b, C):
    return jnp.zeros((C, 1), jnp.float32).at[:b.shape[0], :].set(b)


def init_tcn_params(key, num_inputs, num_channels, kernel_size):
    """Build padded, pre-stacked parameters matching the PyTorch module at init."""
    k = kernel_size
    all_ch = [num_inputs] + list(num_channels)
    C = _round_up(max(all_ch), 16)       # common padded channel count (bf16 sublanes)

    weights, alphas, has_downs, dilations = [], [], [], []
    for i, cout in enumerate(num_channels):
        cin = all_ch[i]
        key, k1, k2, k3, k4, k5, k6 = jax.random.split(key, 7)

        # conv1/conv2: v ~ N(0, 0.01) (init_weights); weight_norm folded (g=||v||).
        v1 = 0.01 * jax.random.normal(k1, (cout, cin, k), jnp.float32)
        w1 = _fold_weight_norm(v1, jnp.sqrt(jnp.sum(v1 * v1, axis=(1, 2), keepdims=True)))
        v2 = 0.01 * jax.random.normal(k2, (cout, cout, k), jnp.float32)
        w2 = _fold_weight_norm(v2, jnp.sqrt(jnp.sum(v2 * v2, axis=(1, 2), keepdims=True)))

        # Conv1d default bias init: U(-1/sqrt(fan_in), 1/sqrt(fan_in)).
        bnd1 = 1.0 / float(cin * k) ** 0.5
        b1 = jax.random.uniform(k3, (cout, 1), jnp.float32, -bnd1, bnd1)
        bnd2 = 1.0 / float(cout * k) ** 0.5
        b2 = jax.random.uniform(k4, (cout, 1), jnp.float32, -bnd2, bnd2)

        w1s, w1l = _split_taps(w1, C)
        w2s, w2l = _split_taps(w2, C)
        layer = ([w1s] if k > 1 else []) + [w1l, _pad_bias(b1, C)]
        layer += ([w2s] if k > 1 else []) + [w2l, _pad_bias(b2, C)]

        has_down = cin != cout
        if has_down:                      # 1x1 downsample Conv1d
            wdm = 0.01 * jax.random.normal(k5, (cout, cin), jnp.float32)
            bndd = 1.0 / float(cin) ** 0.5
            bdm = jax.random.uniform(k6, (cout, 1), jnp.float32, -bndd, bndd)
            wd = (jnp.zeros((C, C), jnp.float32)
                  .at[:cout, :cin].set(wdm).astype(jnp.bfloat16))
            layer += [wd, _pad_bias(bdm, C)]

        weights += layer
        has_downs.append(has_down)
        dilations.append(2 ** i)
        alphas += [0.25, 0.25, 0.25]      # nn.PReLU default slope (relu1, relu2, final)

    return {
        "C": C,
        "weights": weights,
        "alphas": jnp.asarray(alphas, jnp.float32),
        "has_downs": tuple(has_downs),
        "dilations": tuple(dilations),
        "cout_last": num_channels[-1],
    }


if __name__ == "__main__":
    key = jax.random.PRNGKey(0)
    pkey, xkey = jax.random.split(key)

    B, Cin, L = 2, 4, 16
    num_channels = [8, 8]                 # two TemporalBlocks, dilations 1 and 2
    kernel_size = 2

    params = init_tcn_params(pkey, Cin, num_channels, kernel_size)
    x = jax.random.normal(xkey, (B, Cin, L), jnp.float32)

    y = temporal_conv_net(x, params, kernel_size=kernel_size)
    y = jax.block_until_ready(y)
    assert y.shape == (B, num_channels[-1], L)
    assert bool(jnp.all(jnp.isfinite(y)))
    print("KERNEL_OK")
</pallas_src>

<mosaic_0001>
module attributes {stable_mosaic.version = 11 : i64} {
  func.func @_tcn_fused_kernel(%arg0: i32, %arg1: memref<2x16x128xf32, #tpu.memory_space<vmem>>, %arg2: memref<16x16xbf16, #tpu.memory_space<vmem>>, %arg3: memref<16x16xbf16, #tpu.memory_space<vmem>>, %arg4: memref<16x1xf32, #tpu.memory_space<vmem>>, %arg5: memref<16x16xbf16, #tpu.memory_space<vmem>>, %arg6: memref<16x16xbf16, #tpu.memory_space<vmem>>, %arg7: memref<16x1xf32, #tpu.memory_space<vmem>>, %arg8: memref<16x16xbf16, #tpu.memory_space<vmem>>, %arg9: memref<16x1xf32, #tpu.memory_space<vmem>>, %arg10: memref<16x16xbf16, #tpu.memory_space<vmem>>, %arg11: memref<16x16xbf16, #tpu.memory_space<vmem>>, %arg12: memref<16x1xf32, #tpu.memory_space<vmem>>, %arg13: memref<16x16xbf16, #tpu.memory_space<vmem>>, %arg14: memref<16x16xbf16, #tpu.memory_space<vmem>>, %arg15: memref<16x1xf32, #tpu.memory_space<vmem>>, %arg16: memref<6xf32, #tpu.memory_space<smem>>, %arg17: memref<2x16x128xf32, #tpu.memory_space<vmem>>, %arg18: memref<16x128xf32, #tpu.memory_space<vmem>>, %arg19: memref<16x128xbf16, #tpu.memory_space<vmem>>) attributes {dimension_semantics = [#tpu.dimension_semantics<parallel>], iteration_bounds = array<i64: 1>, scalar_prefetch = 0 : i64, scratch_operands = 2 : i64, tpu.core_type = #tpu.core_type<tc>, window_params = [{transform_indices = @transform_0, window_bounds = array<i64: 2, 16, 128>}, {pipeline_mode = #tpu.pipeline_mode<synchronous>, transform_indices = @transform_1, window_bounds = array<i64: 16, 16>}, {pipeline_mode = #tpu.pipeline_mode<synchronous>, transform_indices = @transform_2, window_bounds = array<i64: 16, 16>}, {pipeline_mode = #tpu.pipeline_mode<synchronous>, transform_indices = @transform_3, window_bounds = array<i64: 16, 1>}, {pipeline_mode = #tpu.pipeline_mode<synchronous>, transform_indices = @transform_4, window_bounds = array<i64: 16, 16>}, {pipeline_mode = #tpu.pipeline_mode<synchronous>, transform_indices = @transform_5, window_bounds = array<i64: 16, 16>}, {pipeline_mode = #tpu.pipeline_mode<synchronous>, transform_indices = @transform_6, window_bounds = array<i64: 16, 1>}, {pipeline_mode = #tpu.pipeline_mode<synchronous>, transform_indices = @transform_7, window_bounds = array<i64: 16, 16>}, {pipeline_mode = #tpu.pipeline_mode<synchronous>, transform_indices = @transform_8, window_bounds = array<i64: 16, 1>}, {pipeline_mode = #tpu.pipeline_mode<synchronous>, transform_indices = @transform_9, window_bounds = array<i64: 16, 16>}, {pipeline_mode = #tpu.pipeline_mode<synchronous>, transform_indices = @transform_10, window_bounds = array<i64: 16, 16>}, {pipeline_mode = #tpu.pipeline_mode<synchronous>, transform_indices = @transform_11, window_bounds = array<i64: 16, 1>}, {pipeline_mode = #tpu.pipeline_mode<synchronous>, transform_indices = @transform_12, window_bounds = array<i64: 16, 16>}, {pipeline_mode = #tpu.pipeline_mode<synchronous>, transform_indices = @transform_13, window_bounds = array<i64: 16, 16>}, {pipeline_mode = #tpu.pipeline_mode<synchronous>, transform_indices = @transform_14, window_bounds = array<i64: 16, 1>}, {transform_indices = @transform_15, window_bounds = array<i64: 6>}, {transform_indices = @transform_16, window_bounds = array<i64: 2, 16, 128>}]} {
    %c0 = arith.constant 0 : index
    %c0_0 = arith.constant 0 : index
    %c0_1 = arith.constant 0 : index
    %0 = vector.load %arg1[%c0, %c0_0, %c0_1] : memref<2x16x128xf32, #tpu.memory_space<vmem>>, vector<1x16x128xf32>
    %1 = vector.shape_cast %0 : vector<1x16x128xf32> to vector<16x128xf32>
    %c0_2 = arith.constant 0 : index
    %c0_3 = arith.constant 0 : index
    %2 = vector.load %arg18[%c0_2, %c0_3] : memref<16x128xf32, #tpu.memory_space<vmem>>, vector<16x128xf32>
    tpu.vector_store %arg18[%c0_2, %c0_3], %1 {strides = array<i32>} : memref<16x128xf32, #tpu.memory_space<vmem>>, vector<16x128xf32>,
    %c0_4 = arith.constant 0 : index
    %3 = memref.load %arg16[%c0_4] : memref<6xf32, #tpu.memory_space<smem>>
    %c1 = arith.constant 1 : index
    %4 = memref.load %arg16[%c1] : memref<6xf32, #tpu.memory_space<smem>>
    %c2 = arith.constant 2 : index
    %5 = memref.load %arg16[%c2] : memref<6xf32, #tpu.memory_space<smem>>
    %c0_5 = arith.constant 0 : index
    %c0_6 = arith.constant 0 : index
    %6 = vector.load %arg18[%c0_5, %c0_6] : memref<16x128xf32, #tpu.memory_space<vmem>>, vector<16x128xf32>
    %7 = tpu.iota {dimensions = array<i32: 1>} : vector<16x128xi32>
    %c1_i32 = arith.constant 1 : i32
    %8 = tpu.dynamic_rotate %6 by %c1_i32 dim 1 : vector<16x128xf32>, i32 -> vector<16x128xf32>
    %c1_i32_7 = arith.constant 1 : i32
    %9 = vector.broadcast %c1_i32_7 : i32 to vector<16x128xi32>
    %10 = arith.cmpi sge, %7, %9 : vector<16x128xi32>
    %cst = arith.constant 0.000000e+00 : f32
    %11 = vector.broadcast %cst : f32 to vector<16x128xf32>
    %12 = arith.select %10, %8, %11 : vector<16x128xi1>, vector<16x128xf32>
    %13 = arith.truncf %12 : vector<16x128xf32> to vector<16x128xbf16>
    %c0_8 = arith.constant 0 : index
    %c0_9 = arith.constant 0 : index
    %14 = vector.load %arg19[%c0_8, %c0_9] : memref<16x128xbf16, #tpu.memory_space<vmem>>, vector<16x128xbf16>
    tpu.vector_store %arg19[%c0_8, %c0_9], %13 {strides = array<i32>} : memref<16x128xbf16, #tpu.memory_space<vmem>>, vector<16x128xbf16>,
    %c0_10 = arith.constant 0 : index
    %c0_11 = arith.constant 0 : index
    %15 = vector.load %arg2[%c0_10, %c0_11] : memref<16x16xbf16, #tpu.memory_space<vmem>>, vector<16x16xbf16>
    %c0_12 = arith.constant 0 : index
    %c0_13 = arith.constant 0 : index
    %16 = vector.load %arg19[%c0_12, %c0_13] : memref<16x128xbf16, #tpu.memory_space<vmem>>, vector<16x128xbf16>
    %cst_14 = arith.constant dense<0.000000e+00> : vector<16x128xf32>
    %17 = tpu.matmul %15, %16, %cst_14 {dimension_numbers = #tpu.dot_dimension_numbers<[1], [0], [0], [1], [0, 0, 1, 1], [], []>} : vector<16x16xbf16>, vector<16x128xbf16>, vector<16x128xf32> -> vector<16x128xf32>
    %c0_15 = arith.constant 0 : index
    %c0_16 = arith.constant 0 : index
    %18 = vector.load %arg3[%c0_15, %c0_16] : memref<16x16xbf16, #tpu.memory_space<vmem>>, vector<16x16xbf16>
    %19 = arith.truncf %6 : vector<16x128xf32> to vector<16x128xbf16>
    %cst_17 = arith.constant dense<0.000000e+00> : vector<16x128xf32>
    %20 = tpu.matmul %18, %19, %cst_17 {dimension_numbers = #tpu.dot_dimension_numbers<[1], [0], [0], [1], [0, 0, 1, 1], [], []>} : vector<16x16xbf16>, vector<16x128xbf16>, vector<16x128xf32> -> vector<16x128xf32>
    %21 = arith.addf %17, %20 : vector<16x128xf32>
    %c0_18 = arith.constant 0 : index
    %c0_19 = arith.constant 0 : index
    %22 = vector.load %arg4[%c0_18, %c0_19] : memref<16x1xf32, #tpu.memory_space<vmem>>, vector<16x1xf32>
    %23 = vector.broadcast %22 : vector<16x1xf32> to vector<16x128xf32>
    %24 = arith.addf %21, %23 : vector<16x128xf32>
    %cst_20 = arith.constant 0.000000e+00 : f32
    %25 = vector.broadcast %cst_20 : f32 to vector<16x128xf32>
    %26 = arith.cmpf ogt, %24, %25 : vector<16x128xf32>
    %27 = vector.broadcast %3 : f32 to vector<16x128xf32>
    %28 = arith.mulf %27, %24 : vector<16x128xf32>
    %29 = arith.select %26, %24, %28 : vector<16x128xi1>, vector<16x128xf32>
    %30 = tpu.iota {dimensions = array<i32: 1>} : vector<16x128xi32>
    %c1_i32_21 = arith.constant 1 : i32
    %31 = tpu.dynamic_rotate %29 by %c1_i32_21 dim 1 : vector<16x128xf32>, i32 -> vector<16x128xf32>
    %c1_i32_22 = arith.constant 1 : i32
    %32 = vector.broadcast %c1_i32_22 : i32 to vector<16x128xi32>
    %33 = arith.cmpi sge, %30, %32 : vector<16x128xi32>
    %cst_23 = arith.constant 0.000000e+00 : f32
    %34 = vector.broadcast %cst_23 : f32 to vector<16x128xf32>
    %35 = arith.select %33, %31, %34 : vector<16x128xi1>, vector<16x128xf32>
    %36 = arith.truncf %35 : vector<16x128xf32> to vector<16x128xbf16>
    %c0_24 = arith.constant 0 : index
    %c0_25 = arith.constant 0 : index
    %37 = vector.load %arg19[%c0_24, %c0_25] : memref<16x128xbf16, #tpu.memory_space<vmem>>, vector<16x128xbf16>
    tpu.vector_store %arg19[%c0_24, %c0_25], %36 {strides = array<i32>} : memref<16x128xbf16, #tpu.memory_space<vmem>>, vector<16x128xbf16>,
    %c0_26 = arith.constant 0 : index
    %c0_27 = arith.constant 0 : index
    %38 = vector.load %arg5[%c0_26, %c0_27] : memref<16x16xbf16, #tpu.memory_space<vmem>>, vector<16x16xbf16>
    %c0_28 = arith.constant 0 : index
    %c0_29 = arith.constant 0 : index
    %39 = vector.load %arg19[%c0_28, %c0_29] : memref<16x128xbf16, #tpu.memory_space<vmem>>, vector<16x128xbf16>
    %cst_30 = arith.constant dense<0.000000e+00> : vector<16x128xf32>
    %40 = tpu.matmul %38, %39, %cst_30 {dimension_numbers = #tpu.dot_dimension_numbers<[1], [0], [0], [1], [0, 0, 1, 1], [], []>} : vector<16x16xbf16>, vector<16x128xbf16>, vector<16x128xf32> -> vector<16x128xf32>
    %c0_31 = arith.constant 0 : index
    %c0_32 = arith.constant 0 : index
    %41 = vector.load %arg6[%c0_31, %c0_32] : memref<16x16xbf16, #tpu.memory_space<vmem>>, vector<16x16xbf16>
    %42 = arith.truncf %29 : vector<16x128xf32> to vector<16x128xbf16>
    %cst_33 = arith.constant dense<0.000000e+00> : vector<16x128xf32>
    %43 = tpu.matmul %41, %42, %cst_33 {dimension_numbers = #tpu.dot_dimension_numbers<[1], [0], [0], [1], [0, 0, 1, 1], [], []>} : vector<16x16xbf16>, vector<16x128xbf16>, vector<16x128xf32> -> vector<16x128xf32>
    %44 = arith.addf %40, %43 : vector<16x128xf32>
    %c0_34 = arith.constant 0 : index
    %c0_35 = arith.constant 0 : index
    %45 = vector.load %arg7[%c0_34, %c0_35] : memref<16x1xf32, #tpu.memory_space<vmem>>, vector<16x1xf32>
    %46 = vector.broadcast %45 : vector<16x1xf32> to vector<16x128xf32>
    %47 = arith.addf %44, %46 : vector<16x128xf32>
    %cst_36 = arith.constant 0.000000e+00 : f32
    %48 = vector.broadcast %cst_36 : f32 to vector<16x128xf32>
    %49 = arith.cmpf ogt, %47, %48 : vector<16x128xf32>
    %50 = vector.broadcast %4 : f32 to vector<16x128xf32>
    %51 = arith.mulf %50, %47 : vector<16x128xf32>
    %52 = arith.select %49, %47, %51 : vector<16x128xi1>, vector<16x128xf32>
    %c0_37 = arith.constant 0 : index
    %c0_38 = arith.constant 0 : index
    %53 = vector.load %arg8[%c0_37, %c0_38] : memref<16x16xbf16, #tpu.memory_space<vmem>>, vector<16x16xbf16>
    %c0_39 = arith.constant 0 : index
    %c0_40 = arith.constant 0 : index
    %54 = vector.load %arg18[%c0_39, %c0_40] : memref<16x128xf32, #tpu.memory_space<vmem>>, vector<16x128xf32>
    %55 = arith.truncf %54 : vector<16x128xf32> to vector<16x128xbf16>
    %cst_41 = arith.constant dense<0.000000e+00> : vector<16x128xf32>
    %56 = tpu.matmul %53, %55, %cst_41 {dimension_numbers = #tpu.dot_dimension_numbers<[1], [0], [0], [1], [0, 0, 1, 1], [], []>} : vector<16x16xbf16>, vector<16x128xbf16>, vector<16x128xf32> -> vector<16x128xf32>
    %c0_42 = arith.constant 0 : index
    %c0_43 = arith.constant 0 : index
    %57 = vector.load %arg9[%c0_42, %c0_43] : memref<16x1xf32, #tpu.memory_space<vmem>>, vector<16x1xf32>
    %58 = vector.broadcast %57 : vector<16x1xf32> to vector<16x128xf32>
    %59 = arith.addf %56, %58 : vector<16x128xf32>
    %60 = arith.addf %52, %59 : vector<16x128xf32>
    %cst_44 = arith.constant 0.000000e+00 : f32
    %61 = vector.broadcast %cst_44 : f32 to vector<16x128xf32>
    %62 = arith.cmpf ogt, %60, %61 : vector<16x128xf32>
    %63 = vector.broadcast %5 : f32 to vector<16x128xf32>
    %64 = arith.mulf %63, %60 : vector<16x128xf32>
    %65 = arith.select %62, %60, %64 : vector<16x128xi1>, vector<16x128xf32>
    %c0_45 = arith.constant 0 : index
    %c0_46 = arith.constant 0 : index
    %66 = vector.load %arg18[%c0_45, %c0_46] : memref<16x128xf32, #tpu.memory_space<vmem>>, vector<16x128xf32>
    tpu.vector_store %arg18[%c0_45, %c0_46], %65 {strides = array<i32>} : memref<16x128xf32, #tpu.memory_space<vmem>>, vector<16x128xf32>,
    %c3 = arith.constant 3 : index
    %67 = memref.load %arg16[%c3] : memref<6xf32, #tpu.memory_space<smem>>
    %c4 = arith.constant 4 : index
    %68 = memref.load %arg16[%c4] : memref<6xf32, #tpu.memory_space<smem>>
    %c5 = arith.constant 5 : index
    %69 = memref.load %arg16[%c5] : memref<6xf32, #tpu.memory_space<smem>>
    %c0_47 = arith.constant 0 : index
    %c0_48 = arith.constant 0 : index
    %70 = vector.load %arg18[%c0_47, %c0_48] : memref<16x128xf32, #tpu.memory_space<vmem>>, vector<16x128xf32>
    %71 = tpu.iota {dimensions = array<i32: 1>} : vector<16x128xi32>
    %c2_i32 = arith.constant 2 : i32
    %72 = tpu.dynamic_rotate %70 by %c2_i32 dim 1 : vector<16x128xf32>, i32 -> vector<16x128xf32>
    %c2_i32_49 = arith.constant 2 : i32
    %73 = vector.broadcast %c2_i32_49 : i32 to vector<16x128xi32>
    %74 = arith.cmpi sge, %71, %73 : vector<16x128xi32>
    %cst_50 = arith.constant 0.000000e+00 : f32
    %75 = vector.broadcast %cst_50 : f32 to vector<16x128xf32>
    %76 = arith.select %74, %72, %75 : vector<16x128xi1>, vector<16x128xf32>
    %77 = arith.truncf %76 : vector<16x128xf32> to vector<16x128xbf16>
    %c0_51 = arith.constant 0 : index
    %c0_52 = arith.constant 0 : index
    %78 = vector.load %arg19[%c0_51, %c0_52] : memref<16x128xbf16, #tpu.memory_space<vmem>>, vector<16x128xbf16>
    tpu.vector_store %arg19[%c0_51, %c0_52], %77 {strides = array<i32>} : memref<16x128xbf16, #tpu.memory_space<vmem>>, vector<16x128xbf16>,
    %c0_53 = arith.constant 0 : index
    %c0_54 = arith.constant 0 : index
    %79 = vector.load %arg10[%c0_53, %c0_54] : memref<16x16xbf16, #tpu.memory_space<vmem>>, vector<16x16xbf16>
    %c0_55 = arith.constant 0 : index
    %c0_56 = arith.constant 0 : index
    %80 = vector.load %arg19[%c0_55, %c0_56] : memref<16x128xbf16, #tpu.memory_space<vmem>>, vector<16x128xbf16>
    %cst_57 = arith.constant dense<0.000000e+00> : vector<16x128xf32>
    %81 = tpu.matmul %79, %80, %cst_57 {dimension_numbers = #tpu.dot_dimension_numbers<[1], [0], [0], [1], [0, 0, 1, 1], [], []>} : vector<16x16xbf16>, vector<16x128xbf16>, vector<16x128xf32> -> vector<16x128xf32>
    %c0_58 = arith.constant 0 : index
    %c0_59 = arith.constant 0 : index
    %82 = vector.load %arg11[%c0_58, %c0_59] : memref<16x16xbf16, #tpu.memory_space<vmem>>, vector<16x16xbf16>
    %83 = arith.truncf %70 : vector<16x128xf32> to vector<16x128xbf16>
    %cst_60 = arith.constant dense<0.000000e+00> : vector<16x128xf32>
    %84 = tpu.matmul %82, %83, %cst_60 {dimension_numbers = #tpu.dot_dimension_numbers<[1], [0], [0], [1], [0, 0, 1, 1], [], []>} : vector<16x16xbf16>, vector<16x128xbf16>, vector<16x128xf32> -> vector<16x128xf32>
    %85 = arith.addf %81, %84 : vector<16x128xf32>
    %c0_61 = arith.constant 0 : index
    %c0_62 = arith.constant 0 : index
    %86 = vector.load %arg12[%c0_61, %c0_62] : memref<16x1xf32, #tpu.memory_space<vmem>>, vector<16x1xf32>
    %87 = vector.broadcast %86 : vector<16x1xf32> to vector<16x128xf32>
    %88 = arith.addf %85, %87 : vector<16x128xf32>
    %cst_63 = arith.constant 0.000000e+00 : f32
    %89 = vector.broadcast %cst_63 : f32 to vector<16x128xf32>
    %90 = arith.cmpf ogt, %88, %89 : vector<16x128xf32>
    %91 = vector.broadcast %67 : f32 to vector<16x128xf32>
    %92 = arith.mulf %91, %88 : vector<16x128xf32>
    %93 = arith.select %90, %88, %92 : vector<16x128xi1>, vector<16x128xf32>
    %94 = tpu.iota {dimensions = array<i32: 1>} : vector<16x128xi32>
    %c2_i32_64 = arith.constant 2 : i32
    %95 = tpu.dynamic_rotate %93 by %c2_i32_64 dim 1 : vector<16x128xf32>, i32 -> vector<16x128xf32>
    %c2_i32_65 = arith.constant 2 : i32
    %96 = vector.broadcast %c2_i32_65 : i32 to vector<16x128xi32>
    %97 = arith.cmpi sge, %94, %96 : vector<16x128xi32>
    %cst_66 = arith.constant 0.000000e+00 : f32
    %98 = vector.broadcast %cst_66 : f32 to vector<16x128xf32>
    %99 = arith.select %97, %95, %98 : vector<16x128xi1>, vector<16x128xf32>
    %100 = arith.truncf %99 : vector<16x128xf32> to vector<16x128xbf16>
    %c0_67 = arith.constant 0 : index
    %c0_68 = arith.constant 0 : index
    %101 = vector.load %arg19[%c0_67, %c0_68] : memref<16x128xbf16, #tpu.memory_space<vmem>>, vector<16x128xbf16>
    tpu.vector_store %arg19[%c0_67, %c0_68], %100 {strides = array<i32>} : memref<16x128xbf16, #tpu.memory_space<vmem>>, vector<16x128xbf16>,
    %c0_69 = arith.constant 0 : index
    %c0_70 = arith.constant 0 : index
    %102 = vector.load %arg13[%c0_69, %c0_70] : memref<16x16xbf16, #tpu.memory_space<vmem>>, vector<16x16xbf16>
    %c0_71 = arith.constant 0 : index
    %c0_72 = arith.constant 0 : index
    %103 = vector.load %arg19[%c0_71, %c0_72] : memref<16x128xbf16, #tpu.memory_space<vmem>>, vector<16x128xbf16>
    %cst_73 = arith.constant dense<0.000000e+00> : vector<16x128xf32>
    %104 = tpu.matmul %102, %103, %cst_73 {dimension_numbers = #tpu.dot_dimension_numbers<[1], [0], [0], [1], [0, 0, 1, 1], [], []>} : vector<16x16xbf16>, vector<16x128xbf16>, vector<16x128xf32> -> vector<16x128xf32>
    %c0_74 = arith.constant 0 : index
    %c0_75 = arith.constant 0 : index
    %105 = vector.load %arg14[%c0_74, %c0_75] : memref<16x16xbf16, #tpu.memory_space<vmem>>, vector<16x16xbf16>
    %106 = arith.truncf %93 : vector<16x128xf32> to vector<16x128xbf16>
    %cst_76 = arith.constant dense<0.000000e+00> : vector<16x128xf32>
    %107 = tpu.matmul %105, %106, %cst_76 {dimension_numbers = #tpu.dot_dimension_numbers<[1], [0], [0], [1], [0, 0, 1, 1], [], []>} : vector<16x16xbf16>, vector<16x128xbf16>, vector<16x128xf32> -> vector<16x128xf32>
    %108 = arith.addf %104, %107 : vector<16x128xf32>
    %c0_77 = arith.constant 0 : index
    %c0_78 = arith.constant 0 : index
    %109 = vector.load %arg15[%c0_77, %c0_78] : memref<16x1xf32, #tpu.memory_space<vmem>>, vector<16x1xf32>
    %110 = vector.broadcast %109 : vector<16x1xf32> to vector<16x128xf32>
    %111 = arith.addf %108, %110 : vector<16x128xf32>
    %cst_79 = arith.constant 0.000000e+00 : f32
    %112 = vector.broadcast %cst_79 : f32 to vector<16x128xf32>
    %113 = arith.cmpf ogt, %111, %112 : vector<16x128xf32>
    %114 = vector.broadcast %68 : f32 to vector<16x128xf32>
    %115 = arith.mulf %114, %111 : vector<16x128xf32>
    %116 = arith.select %113, %111, %115 : vector<16x128xi1>, vector<16x128xf32>
    %c0_80 = arith.constant 0 : index
    %c0_81 = arith.constant 0 : index
    %117 = vector.load %arg18[%c0_80, %c0_81] : memref<16x128xf32, #tpu.memory_space<vmem>>, vector<16x128xf32>
    %118 = arith.addf %116, %117 : vector<16x128xf32>
    %cst_82 = arith.constant 0.000000e+00 : f32
    %119 = vector.broadcast %cst_82 : f32 to vector<16x128xf32>
    %120 = arith.cmpf ogt, %118, %119 : vector<16x128xf32>
    %121 = vector.broadcast %69 : f32 to vector<16x128xf32>
    %122 = arith.mulf %121, %118 : vector<16x128xf32>
    %123 = arith.select %120, %118, %122 : vector<16x128xi1>, vector<16x128xf32>
    %c0_83 = arith.constant 0 : index
    %c0_84 = arith.constant 0 : index
    %c0_85 = arith.constant 0 : index
    %124 = vector.load %arg17[%c0_83, %c0_84, %c0_85] : memref<2x16x128xf32, #tpu.memory_space<vmem>>, vector<1x16x128xf32>
    %125 = vector.shape_cast %124 : vector<1x16x128xf32> to vector<16x128xf32>
    %126 = vector.shape_cast %123 : vector<16x128xf32> to vector<1x16x128xf32>
    tpu.vector_store %arg17[%c0_83, %c0_84, %c0_85], %126 {strides = array<i32>} : memref<2x16x128xf32, #tpu.memory_space<vmem>>, vector<1x16x128xf32>,
    %c1_86 = arith.constant 1 : index
    %c0_87 = arith.constant 0 : index
    %c0_88 = arith.constant 0 : index
    %127 = vector.load %arg1[%c1_86, %c0_87, %c0_88] : memref<2x16x128xf32, #tpu.memory_space<vmem>>, vector<1x16x128xf32>
    %128 = vector.shape_cast %127 : vector<1x16x128xf32> to vector<16x128xf32>
    %c0_89 = arith.constant 0 : index
    %c0_90 = arith.constant 0 : index
    %129 = vector.load %arg18[%c0_89, %c0_90] : memref<16x128xf32, #tpu.memory_space<vmem>>, vector<16x128xf32>
    tpu.vector_store %arg18[%c0_89, %c0_90], %128 {strides = array<i32>} : memref<16x128xf32, #tpu.memory_space<vmem>>, vector<16x128xf32>,
    %c0_91 = arith.constant 0 : index
    %130 = memref.load %arg16[%c0_91] : memref<6xf32, #tpu.memory_space<smem>>
    %c1_92 = arith.constant 1 : index
    %131 = memref.load %arg16[%c1_92] : memref<6xf32, #tpu.memory_space<smem>>
    %c2_93 = arith.constant 2 : index
    %132 = memref.load %arg16[%c2_93] : memref<6xf32, #tpu.memory_space<smem>>
    %c0_94 = arith.constant 0 : index
    %c0_95 = arith.constant 0 : index
    %133 = vector.load %arg18[%c0_94, %c0_95] : memref<16x128xf32, #tpu.memory_space<vmem>>, vector<16x128xf32>
    %134 = tpu.iota {dimensions = array<i32: 1>} : vector<16x128xi32>
    %c1_i32_96 = arith.constant 1 : i32
    %135 = tpu.dynamic_rotate %133 by %c1_i32_96 dim 1 : vector<16x128xf32>, i32 -> vector<16x128xf32>
    %c1_i32_97 = arith.constant 1 : i32
    %136 = vector.broadcast %c1_i32_97 : i32 to vector<16x128xi32>
    %137 = arith.cmpi sge, %134, %136 : vector<16x128xi32>
    %cst_98 = arith.constant 0.000000e+00 : f32
    %138 = vector.broadcast %cst_98 : f32 to vector<16x128xf32>
    %139 = arith.select %137, %135, %138 : vector<16x128xi1>, vector<16x128xf32>
    %140 = arith.truncf %139 : vector<16x128xf32> to vector<16x128xbf16>
    %c0_99 = arith.constant 0 : index
    %c0_100 = arith.constant 0 : index
    %141 = vector.load %arg19[%c0_99, %c0_100] : memref<16x128xbf16, #tpu.memory_space<vmem>>, vector<16x128xbf16>
    tpu.vector_store %arg19[%c0_99, %c0_100], %140 {strides = array<i32>} : memref<16x128xbf16, #tpu.memory_space<vmem>>, vector<16x128xbf16>,
    %c0_101 = arith.constant 0 : index
    %c0_102 = arith.constant 0 : index
    %142 = vector.load %arg2[%c0_101, %c0_102] : memref<16x16xbf16, #tpu.memory_space<vmem>>, vector<16x16xbf16>
    %c0_103 = arith.constant 0 : index
    %c0_104 = arith.constant 0 : index
    %143 = vector.load %arg19[%c0_103, %c0_104] : memref<16x128xbf16, #tpu.memory_space<vmem>>, vector<16x128xbf16>
    %cst_105 = arith.constant dense<0.000000e+00> : vector<16x128xf32>
    %144 = tpu.matmul %142, %143, %cst_105 {dimension_numbers = #tpu.dot_dimension_numbers<[1], [0], [0], [1], [0, 0, 1, 1], [], []>} : vector<16x16xbf16>, vector<16x128xbf16>, vector<16x128xf32> -> vector<16x128xf32>
    %c0_106 = arith.constant 0 : index
    %c0_107 = arith.constant 0 : index
    %145 = vector.load %arg3[%c0_106, %c0_107] : memref<16x16xbf16, #tpu.memory_space<vmem>>, vector<16x16xbf16>
    %146 = arith.truncf %133 : vector<16x128xf32> to vector<16x128xbf16>
    %cst_108 = arith.constant dense<0.000000e+00> : vector<16x128xf32>
    %147 = tpu.matmul %145, %146, %cst_108 {dimension_numbers = #tpu.dot_dimension_numbers<[1], [0], [0], [1], [0, 0, 1, 1], [], []>} : vector<16x16xbf16>, vector<16x128xbf16>, vector<16x128xf32> -> vector<16x128xf32>
    %148 = arith.addf %144, %147 : vector<16x128xf32>
    %c0_109 = arith.constant 0 : index
    %c0_110 = arith.constant 0 : index
    %149 = vector.load %arg4[%c0_109, %c0_110] : memref<16x1xf32, #tpu.memory_space<vmem>>, vector<16x1xf32>
    %150 = vector.broadcast %149 : vector<16x1xf32> to vector<16x128xf32>
    %151 = arith.addf %148, %150 : vector<16x128xf32>
    %cst_111 = arith.constant 0.000000e+00 : f32
    %152 = vector.broadcast %cst_111 : f32 to vector<16x128xf32>
    %153 = arith.cmpf ogt, %151, %152 : vector<16x128xf32>
    %154 = vector.broadcast %130 : f32 to vector<16x128xf32>
    %155 = arith.mulf %154, %151 : vector<16x128xf32>
    %156 = arith.select %153, %151, %155 : vector<16x128xi1>, vector<16x128xf32>
    %157 = tpu.iota {dimensions = array<i32: 1>} : vector<16x128xi32>
    %c1_i32_112 = arith.constant 1 : i32
    %158 = tpu.dynamic_rotate %156 by %c1_i32_112 dim 1 : vector<16x128xf32>, i32 -> vector<16x128xf32>
    %c1_i32_113 = arith.constant 1 : i32
    %159 = vector.broadcast %c1_i32_113 : i32 to vector<16x128xi32>
    %160 = arith.cmpi sge, %157, %159 : vector<16x128xi32>
    %cst_114 = arith.constant 0.000000e+00 : f32
    %161 = vector.broadcast %cst_114 : f32 to vector<16x128xf32>
    %162 = arith.select %160, %158, %161 : vector<16x128xi1>, vector<16x128xf32>
    %163 = arith.truncf %162 : vector<16x128xf32> to vector<16x128xbf16>
    %c0_115 = arith.constant 0 : index
    %c0_116 = arith.constant 0 : index
    %164 = vector.load %arg19[%c0_115, %c0_116] : memref<16x128xbf16, #tpu.memory_space<vmem>>, vector<16x128xbf16>
    tpu.vector_store %arg19[%c0_115, %c0_116], %163 {strides = array<i32>} : memref<16x128xbf16, #tpu.memory_space<vmem>>, vector<16x128xbf16>,
    %c0_117 = arith.constant 0 : index
    %c0_118 = arith.constant 0 : index
    %165 = vector.load %arg5[%c0_117, %c0_118] : memref<16x16xbf16, #tpu.memory_space<vmem>>, vector<16x16xbf16>
    %c0_119 = arith.constant 0 : index
    %c0_120 = arith.constant 0 : index
    %166 = vector.load %arg19[%c0_119, %c0_120] : memref<16x128xbf16, #tpu.memory_space<vmem>>, vector<16x128xbf16>
    %cst_121 = arith.constant dense<0.000000e+00> : vector<16x128xf32>
    %167 = tpu.matmul %165, %166, %cst_121 {dimension_numbers = #tpu.dot_dimension_numbers<[1], [0], [0], [1], [0, 0, 1, 1], [], []>} : vector<16x16xbf16>, vector<16x128xbf16>, vector<16x128xf32> -> vector<16x128xf32>
    %c0_122 = arith.constant 0 : index
    %c0_123 = arith.constant 0 : index
    %168 = vector.load %arg6[%c0_122, %c0_123] : memref<16x16xbf16, #tpu.memory_space<vmem>>, vector<16x16xbf16>
    %169 = arith.truncf %156 : vector<16x128xf32> to vector<16x128xbf16>
    %cst_124 = arith.constant dense<0.000000e+00> : vector<16x128xf32>
    %170 = tpu.matmul %168, %169, %cst_124 {dimension_numbers = #tpu.dot_dimension_numbers<[1], [0], [0], [1], [0, 0, 1, 1], [], []>} : vector<16x16xbf16>, vector<16x128xbf16>, vector<16x128xf32> -> vector<16x128xf32>
    %171 = arith.addf %167, %170 : vector<16x128xf32>
    %c0_125 = arith.constant 0 : index
    %c0_126 = arith.constant 0 : index
    %172 = vector.load %arg7[%c0_125, %c0_126] : memref<16x1xf32, #tpu.memory_space<vmem>>, vector<16x1xf32>
    %173 = vector.broadcast %172 : vector<16x1xf32> to vector<16x128xf32>
    %174 = arith.addf %171, %173 : vector<16x128xf32>
    %cst_127 = arith.constant 0.000000e+00 : f32
    %175 = vector.broadcast %cst_127 : f32 to vector<16x128xf32>
    %176 = arith.cmpf ogt, %174, %175 : vector<16x128xf32>
    %177 = vector.broadcast %131 : f32 to vector<16x128xf32>
    %178 = arith.mulf %177, %174 : vector<16x128xf32>
    %179 = arith.select %176, %174, %178 : vector<16x128xi1>, vector<16x128xf32>
    %c0_128 = arith.constant 0 : index
    %c0_129 = arith.constant 0 : index
    %180 = vector.load %arg8[%c0_128, %c0_129] : memref<16x16xbf16, #tpu.memory_space<vmem>>, vector<16x16xbf16>
    %c0_130 = arith.constant 0 : index
    %c0_131 = arith.constant 0 : index
    %181 = vector.load %arg18[%c0_130, %c0_131] : memref<16x128xf32, #tpu.memory_space<vmem>>, vector<16x128xf32>
    %182 = arith.truncf %181 : vector<16x128xf32> to vector<16x128xbf16>
    %cst_132 = arith.constant dense<0.000000e+00> : vector<16x128xf32>
    %183 = tpu.matmul %180, %182, %cst_132 {dimension_numbers = #tpu.dot_dimension_numbers<[1], [0], [0], [1], [0, 0, 1, 1], [], []>} : vector<16x16xbf16>, vector<16x128xbf16>, vector<16x128xf32> -> vector<16x128xf32>
    %c0_133 = arith.constant 0 : index
    %c0_134 = arith.constant 0 : index
    %184 = vector.load %arg9[%c0_133, %c0_134] : memref<16x1xf32, #tpu.memory_space<vmem>>, vector<16x1xf32>
    %185 = vector.broadcast %184 : vector<16x1xf32> to vector<16x128xf32>
    %186 = arith.addf %183, %185 : vector<16x128xf32>
    %187 = arith.addf %179, %186 : vector<16x128xf32>
    %cst_135 = arith.constant 0.000000e+00 : f32
    %188 = vector.broadcast %cst_135 : f32 to vector<16x128xf32>
    %189 = arith.cmpf ogt, %187, %188 : vector<16x128xf32>
    %190 = vector.broadcast %132 : f32 to vector<16x128xf32>
    %191 = arith.mulf %190, %187 : vector<16x128xf32>
    %192 = arith.select %189, %187, %191 : vector<16x128xi1>, vector<16x128xf32>
    %c0_136 = arith.constant 0 : index
    %c0_137 = arith.constant 0 : index
    %193 = vector.load %arg18[%c0_136, %c0_137] : memref<16x128xf32, #tpu.memory_space<vmem>>, vector<16x128xf32>
    tpu.vector_store %arg18[%c0_136, %c0_137], %192 {strides = array<i32>} : memref<16x128xf32, #tpu.memory_space<vmem>>, vector<16x128xf32>,
    %c3_138 = arith.constant 3 : index
    %194 = memref.load %arg16[%c3_138] : memref<6xf32, #tpu.memory_space<smem>>
    %c4_139 = arith.constant 4 : index
    %195 = memref.load %arg16[%c4_139] : memref<6xf32, #tpu.memory_space<smem>>
    %c5_140 = arith.constant 5 : index
    %196 = memref.load %arg16[%c5_140] : memref<6xf32, #tpu.memory_space<smem>>
    %c0_141 = arith.constant 0 : index
    %c0_142 = arith.constant 0 : index
    %197 = vector.load %arg18[%c0_141, %c0_142] : memref<16x128xf32, #tpu.memory_space<vmem>>, vector<16x128xf32>
    %198 = tpu.iota {dimensions = array<i32: 1>} : vector<16x128xi32>
    %c2_i32_143 = arith.constant 2 : i32
    %199 = tpu.dynamic_rotate %197 by %c2_i32_143 dim 1 : vector<16x128xf32>, i32 -> vector<16x128xf32>
    %c2_i32_144 = arith.constant 2 : i32
    %200 = vector.broadcast %c2_i32_144 : i32 to vector<16x128xi32>
    %201 = arith.cmpi sge, %198, %200 : vector<16x128xi32>
    %cst_145 = arith.constant 0.000000e+00 : f32
    %202 = vector.broadcast %cst_145 : f32 to vector<16x128xf32>
    %203 = arith.select %201, %199, %202 : vector<16x128xi1>, vector<16x128xf32>
    %204 = arith.truncf %203 : vector<16x128xf32> to vector<16x128xbf16>
    %c0_146 = arith.constant 0 : index
    %c0_147 = arith.constant 0 : index
    %205 = vector.load %arg19[%c0_146, %c0_147] : memref<16x128xbf16, #tpu.memory_space<vmem>>, vector<16x128xbf16>
    tpu.vector_store %arg19[%c0_146, %c0_147], %204 {strides = array<i32>} : memref<16x128xbf16, #tpu.memory_space<vmem>>, vector<16x128xbf16>,
    %c0_148 = arith.constant 0 : index
    %c0_149 = arith.constant 0 : index
    %206 = vector.load %arg10[%c0_148, %c0_149] : memref<16x16xbf16, #tpu.memory_space<vmem>>, vector<16x16xbf16>
    %c0_150 = arith.constant 0 : index
    %c0_151 = arith.constant 0 : index
    %207 = vector.load %arg19[%c0_150, %c0_151] : memref<16x128xbf16, #tpu.memory_space<vmem>>, vector<16x128xbf16>
    %cst_152 = arith.constant dense<0.000000e+00> : vector<16x128xf32>
    %208 = tpu.matmul %206, %207, %cst_152 {dimension_numbers = #tpu.dot_dimension_numbers<[1], [0], [0], [1], [0, 0, 1, 1], [], []>} : vector<16x16xbf16>, vector<16x128xbf16>, vector<16x128xf32> -> vector<16x128xf32>
    %c0_153 = arith.constant 0 : index
    %c0_154 = arith.constant 0 : index
    %209 = vector.load %arg11[%c0_153, %c0_154] : memref<16x16xbf16, #tpu.memory_space<vmem>>, vector<16x16xbf16>
    %210 = arith.truncf %197 : vector<16x128xf32> to vector<16x128xbf16>
    %cst_155 = arith.constant dense<0.000000e+00> : vector<16x128xf32>
    %211 = tpu.matmul %209, %210, %cst_155 {dimension_numbers = #tpu.dot_dimension_numbers<[1], [0], [0], [1], [0, 0, 1, 1], [], []>} : vector<16x16xbf16>, vector<16x128xbf16>, vector<16x128xf32> -> vector<16x128xf32>
    %212 = arith.addf %208, %211 : vector<16x128xf32>
    %c0_156 = arith.constant 0 : index
    %c0_157 = arith.constant 0 : index
    %213 = vector.load %arg12[%c0_156, %c0_157] : memref<16x1xf32, #tpu.memory_space<vmem>>, vector<16x1xf32>
    %214 = vector.broadcast %213 : vector<16x1xf32> to vector<16x128xf32>
    %215 = arith.addf %212, %214 : vector<16x128xf32>
    %cst_158 = arith.constant 0.000000e+00 : f32
    %216 = vector.broadcast %cst_158 : f32 to vector<16x128xf32>
    %217 = arith.cmpf ogt, %215, %216 : vector<16x128xf32>
    %218 = vector.broadcast %194 : f32 to vector<16x128xf32>
    %219 = arith.mulf %218, %215 : vector<16x128xf32>
    %220 = arith.select %217, %215, %219 : vector<16x128xi1>, vector<16x128xf32>
    %221 = tpu.iota {dimensions = array<i32: 1>} : vector<16x128xi32>
    %c2_i32_159 = arith.constant 2 : i32
    %222 = tpu.dynamic_rotate %220 by %c2_i32_159 dim 1 : vector<16x128xf32>, i32 -> vector<16x128xf32>
    %c2_i32_160 = arith.constant 2 : i32
    %223 = vector.broadcast %c2_i32_160 : i32 to vector<16x128xi32>
    %224 = arith.cmpi sge, %221, %223 : vector<16x128xi32>
    %cst_161 = arith.constant 0.000000e+00 : f32
    %225 = vector.broadcast %cst_161 : f32 to vector<16x128xf32>
    %226 = arith.select %224, %222, %225 : vector<16x128xi1>, vector<16x128xf32>
    %227 = arith.truncf %226 : vector<16x128xf32> to vector<16x128xbf16>
    %c0_162 = arith.constant 0 : index
    %c0_163 = arith.constant 0 : index
    %228 = vector.load %arg19[%c0_162, %c0_163] : memref<16x128xbf16, #tpu.memory_space<vmem>>, vector<16x128xbf16>
    tpu.vector_store %arg19[%c0_162, %c0_163], %227 {strides = array<i32>} : memref<16x128xbf16, #tpu.memory_space<vmem>>, vector<16x128xbf16>,
    %c0_164 = arith.constant 0 : index
    %c0_165 = arith.constant 0 : index
    %229 = vector.load %arg13[%c0_164, %c0_165] : memref<16x16xbf16, #tpu.memory_space<vmem>>, vector<16x16xbf16>
    %c0_166 = arith.constant 0 : index
    %c0_167 = arith.constant 0 : index
    %230 = vector.load %arg19[%c0_166, %c0_167] : memref<16x128xbf16, #tpu.memory_space<vmem>>, vector<16x128xbf16>
    %cst_168 = arith.constant dense<0.000000e+00> : vector<16x128xf32>
    %231 = tpu.matmul %229, %230, %cst_168 {dimension_numbers = #tpu.dot_dimension_numbers<[1], [0], [0], [1], [0, 0, 1, 1], [], []>} : vector<16x16xbf16>, vector<16x128xbf16>, vector<16x128xf32> -> vector<16x128xf32>
    %c0_169 = arith.constant 0 : index
    %c0_170 = arith.constant 0 : index
    %232 = vector.load %arg14[%c0_169, %c0_170] : memref<16x16xbf16, #tpu.memory_space<vmem>>, vector<16x16xbf16>
    %233 = arith.truncf %220 : vector<16x128xf32> to vector<16x128xbf16>
    %cst_171 = arith.constant dense<0.000000e+00> : vector<16x128xf32>
    %234 = tpu.matmul %232, %233, %cst_171 {dimension_numbers = #tpu.dot_dimension_numbers<[1], [0], [0], [1], [0, 0, 1, 1], [], []>} : vector<16x16xbf16>, vector<16x128xbf16>, vector<16x128xf32> -> vector<16x128xf32>
    %235 = arith.addf %231, %234 : vector<16x128xf32>
    %c0_172 = arith.constant 0 : index
    %c0_173 = arith.constant 0 : index
    %236 = vector.load %arg15[%c0_172, %c0_173] : memref<16x1xf32, #tpu.memory_space<vmem>>, vector<16x1xf32>
    %237 = vector.broadcast %236 : vector<16x1xf32> to vector<16x128xf32>
    %238 = arith.addf %235, %237 : vector<16x128xf32>
    %cst_174 = arith.constant 0.000000e+00 : f32
    %239 = vector.broadcast %cst_174 : f32 to vector<16x128xf32>
    %240 = arith.cmpf ogt, %238, %239 : vector<16x128xf32>
    %241 = vector.broadcast %195 : f32 to vector<16x128xf32>
    %242 = arith.mulf %241, %238 : vector<16x128xf32>
    %243 = arith.select %240, %238, %242 : vector<16x128xi1>, vector<16x128xf32>
    %c0_175 = arith.constant 0 : index
    %c0_176 = arith.constant 0 : index
    %244 = vector.load %arg18[%c0_175, %c0_176] : memref<16x128xf32, #tpu.memory_space<vmem>>, vector<16x128xf32>
    %245 = arith.addf %243, %244 : vector<16x128xf32>
    %cst_177 = arith.constant 0.000000e+00 : f32
    %246 = vector.broadcast %cst_177 : f32 to vector<16x128xf32>
    %247 = arith.cmpf ogt, %245, %246 : vector<16x128xf32>
    %248 = vector.broadcast %196 : f32 to vector<16x128xf32>
    %249 = arith.mulf %248, %245 : vector<16x128xf32>
    %250 = arith.select %247, %245, %249 : vector<16x128xi1>, vector<16x128xf32>
    %c1_178 = arith.constant 1 : index
    %c0_179 = arith.constant 0 : index
    %c0_180 = arith.constant 0 : index
    %251 = vector.load %arg17[%c1_178, %c0_179, %c0_180] : memref<2x16x128xf32, #tpu.memory_space<vmem>>, vector<1x16x128xf32>
    %252 = vector.shape_cast %251 : vector<1x16x128xf32> to vector<16x128xf32>
    %253 = vector.shape_cast %250 : vector<16x128xf32> to vector<1x16x128xf32>
    tpu.vector_store %arg17[%c1_178, %c0_179, %c0_180], %253 {strides = array<i32>} : memref<2x16x128xf32, #tpu.memory_space<vmem>>, vector<1x16x128xf32>,
    return
  }
  func.func @transform_0(%arg0: i32) -> (i32, i32, i32) {
    %c0_i32 = arith.constant 0 : i32
    %c0_i32_0 = arith.constant 0 : i32
    %c0_i32_1 = arith.constant 0 : i32
    return %arg0, %c0_i32, %c0_i32_0 : i32, i32, i32
  }
  func.func @transform_1(%arg0: i32) -> (i32, i32) {
    %c0_i32 = arith.constant 0 : i32
    %c0_i32_0 = arith.constant 0 : i32
    %c0_i32_1 = arith.constant 0 : i32
    return %c0_i32, %c0_i32_0 : i32, i32
  }
  func.func @transform_2(%arg0: i32) -> (i32, i32) {
    %c0_i32 = arith.constant 0 : i32
    %c0_i32_0 = arith.constant 0 : i32
    %c0_i32_1 = arith.constant 0 : i32
    return %c0_i32, %c0_i32_0 : i32, i32
  }
  func.func @transform_3(%arg0: i32) -> (i32, i32) {
    %c0_i32 = arith.constant 0 : i32
    %c0_i32_0 = arith.constant 0 : i32
    %c0_i32_1 = arith.constant 0 : i32
    return %c0_i32, %c0_i32_0 : i32, i32
  }
  func.func @transform_4(%arg0: i32) -> (i32, i32) {
    %c0_i32 = arith.constant 0 : i32
    %c0_i32_0 = arith.constant 0 : i32
    %c0_i32_1 = arith.constant 0 : i32
    return %c0_i32, %c0_i32_0 : i32, i32
  }
  func.func @transform_5(%arg0: i32) -> (i32, i32) {
    %c0_i32 = arith.constant 0 : i32
    %c0_i32_0 = arith.constant 0 : i32
    %c0_i32_1 = arith.constant 0 : i32
    return %c0_i32, %c0_i32_0 : i32, i32
  }
  func.func @transform_6(%arg0: i32) -> (i32, i32) {
    %c0_i32 = arith.constant 0 : i32
    %c0_i32_0 = arith.constant 0 : i32
    %c0_i32_1 = arith.constant 0 : i32
    return %c0_i32, %c0_i32_0 : i32, i32
  }
  func.func @transform_7(%arg0: i32) -> (i32, i32) {
    %c0_i32 = arith.constant 0 : i32
    %c0_i32_0 = arith.constant 0 : i32
    %c0_i32_1 = arith.constant 0 : i32
    return %c0_i32, %c0_i32_0 : i32, i32
  }
  func.func @transform_8(%arg0: i32) -> (i32, i32) {
    %c0_i32 = arith.constant 0 : i32
    %c0_i32_0 = arith.constant 0 : i32
    %c0_i32_1 = arith.constant 0 : i32
    return %c0_i32, %c0_i32_0 : i32, i32
  }
  func.func @transform_9(%arg0: i32) -> (i32, i32) {
    %c0_i32 = arith.constant 0 : i32
    %c0_i32_0 = arith.constant 0 : i32
    %c0_i32_1 = arith.constant 0 : i32
    return %c0_i32, %c0_i32_0 : i32, i32
  }
  func.func @transform_10(%arg0: i32) -> (i32, i32) {
    %c0_i32 = arith.constant 0 : i32
    %c0_i32_0 = arith.constant 0 : i32
    %c0_i32_1 = arith.constant 0 : i32
    return %c0_i32, %c0_i32_0 : i32, i32
  }
  func.func @transform_11(%arg0: i32) -> (i32, i32) {
    %c0_i32 = arith.constant 0 : i32
    %c0_i32_0 = arith.constant 0 : i32
    %c0_i32_1 = arith.constant 0 : i32
    return %c0_i32, %c0_i32_0 : i32, i32
  }
  func.func @transform_12(%arg0: i32) -> (i32, i32) {
    %c0_i32 = arith.constant 0 : i32
    %c0_i32_0 = arith.constant 0 : i32
    %c0_i32_1 = arith.constant 0 : i32
    return %c0_i32, %c0_i32_0 : i32, i32
  }
  func.func @transform_13(%arg0: i32) -> (i32, i32) {
    %c0_i32 = arith.constant 0 : i32
    %c0_i32_0 = arith.constant 0 : i32
    %c0_i32_1 = arith.constant 0 : i32
    return %c0_i32, %c0_i32_0 : i32, i32
  }
  func.func @transform_14(%arg0: i32) -> (i32, i32) {
    %c0_i32 = arith.constant 0 : i32
    %c0_i32_0 = arith.constant 0 : i32
    %c0_i32_1 = arith.constant 0 : i32
    return %c0_i32, %c0_i32_0 : i32, i32
  }
  func.func @transform_15(%arg0: i32) -> i32 {
    %c0_i32 = arith.constant 0 : i32
    %c0_i32_0 = arith.constant 0 : i32
    return %c0_i32 : i32
  }
  func.func @transform_16(%arg0: i32) -> (i32, i32, i32) {
    %c0_i32 = arith.constant 0 : i32
    %c0_i32_0 = arith.constant 0 : i32
    %c0_i32_1 = arith.constant 0 : i32
    return %arg0, %c0_i32, %c0_i32_0 : i32, i32, i32
  }
}

</mosaic_0001>

<llo_original>
// kernel: tpu_custom_call.1
$region0: #{tpu_custom_call.1}
  #allocation0 [shape = 'u32[]', space=smem, size = 0x4, offset = 0x4, fixed_abs, tag = 'smem constant byte address 0x4 - core index']
  #allocation1 [shape = 'u32[144,128]{1,0:T(1,128)}', space=vmem, size = 0x12000, scoped, tag = 'internal scratch']
  #allocation2 [shape = 'f32[16,128]{1,0:T(8,128)}', space=vmem, size = 0x2000, scoped, tag = 'scratch operand']
  #allocation3 [shape = 'bf16[16,128]{1,0:T(16,128)(2,1)}', space=vmem, size = 0x1000, scoped, tag = 'scratch operand']
  %s0 = inlined_call_operand.vmem [shape: f32[2,16,128], index: 0, kind: input, shape index: {}]
  %s1 = inlined_call_operand.vmem [shape: bf16[16,16], index: 1, kind: input, shape index: {}]
  %s2 = inlined_call_operand.vmem [shape: bf16[16,16], index: 2, kind: input, shape index: {}]
  %s3 = inlined_call_operand.vmem [shape: f32[16,1], index: 3, kind: input, shape index: {}]
  %s4 = inlined_call_operand.vmem [shape: bf16[16,16], index: 4, kind: input, shape index: {}]
  %s5 = inlined_call_operand.vmem [shape: bf16[16,16], index: 5, kind: input, shape index: {}]
  %s6 = inlined_call_operand.vmem [shape: f32[16,1], index: 6, kind: input, shape index: {}]
  %s7 = inlined_call_operand.vmem [shape: bf16[16,16], index: 7, kind: input, shape index: {}]
  %s8 = inlined_call_operand.vmem [shape: f32[16,1], index: 8, kind: input, shape index: {}]
  %s9 = inlined_call_operand.vmem [shape: bf16[16,16], index: 9, kind: input, shape index: {}]
  %s10 = inlined_call_operand.vmem [shape: bf16[16,16], index: 10, kind: input, shape index: {}]
  %s11 = inlined_call_operand.vmem [shape: f32[16,1], index: 11, kind: input, shape index: {}]
  %s12 = inlined_call_operand.vmem [shape: bf16[16,16], index: 12, kind: input, shape index: {}]
  %s13 = inlined_call_operand.vmem [shape: bf16[16,16], index: 13, kind: input, shape index: {}]
  %s14 = inlined_call_operand.vmem [shape: f32[16,1], index: 14, kind: input, shape index: {}]
  %s15 = inlined_call_operand.vmem [shape: f32[6], index: 15, kind: input, shape index: {}]
  %s16 = inlined_call_operand.hbm [shape: f32[2,16,128], index: 16, kind: output, shape index: {}]
  %s17 = sld [smem:[#allocation0]]
  $region78: #{tpu_custom_call.1} parent=0
    _
  %s19 = ssub.s32 1, %s17
  %s20 = scalar_select 0, %s19, %s17
  $region1: #{tpu_custom_call.1} parent=0
    #allocation4 [shape = 'u8[512]{0}', space=smem, size = 0x200, scoped, tag = 'input window, operand 15, single buffered']
    #allocation5 [shape = 's32[1]{0}', space=sflag, size = 0x4, scoped, tag = 'scoped memory for tpu_custom_call.1']
    #allocation6 [shape = 's32[1]{0}', space=sflag, size = 0x4, scoped, tag = 'scoped memory for tpu_custom_call.1']
    #allocation7 [shape = 'u8[16384]{0}', space=vmem, size = 0x4000, scoped, tag = 'output window, operand 0, single buffered']
    %21 = vsyncpa [#allocation6], 0
    %22 = vsyncpa [#allocation5], 0
    // Predicated region
    $region2: #{tpu_custom_call.1} parent=1 // pred_check
      _
    $region3: #{tpu_custom_call.1} parent=1 // pred_check_branch
      %24 = sbr.rel (0) target = $region5
    $region4: #{tpu_custom_call.1} parent=1 // pred_region
      _
    $region5: #{tpu_custom_call.1} parent=1 // pred_fallthru
      _
    // Predicated region
    $region6: #{tpu_custom_call.1} parent=1 // pred_check
      _
    $region7: #{tpu_custom_call.1} parent=1 // pred_check_branch
      %26 = sbr.rel (0) target = $region9
    $region8: #{tpu_custom_call.1} parent=1 // pred_region
      _
    $region9: #{tpu_custom_call.1} parent=1 // pred_fallthru
      _
    // Predicated region
    $region10: #{tpu_custom_call.1} parent=1 // pred_check
      _
    $region11: #{tpu_custom_call.1} parent=1 // pred_check_branch
      %28 = sbr.rel (0) target = $region13
    $region12: #{tpu_custom_call.1} parent=1 // pred_region
      _
    $region13: #{tpu_custom_call.1} parent=1 // pred_fallthru
      _
    // Predicated region
    $region14: #{tpu_custom_call.1} parent=1 // pred_check
      _
    $region15: #{tpu_custom_call.1} parent=1 // pred_check_branch
      %30 = sbr.rel (0) target = $region17
    $region16: #{tpu_custom_call.1} parent=1 // pred_region
      _
    $region17: #{tpu_custom_call.1} parent=1 // pred_fallthru
      _
    // Predicated region
    $region18: #{tpu_custom_call.1} parent=1 // pred_check
      _
    $region19: #{tpu_custom_call.1} parent=1 // pred_check_branch
      %32 = sbr.rel (0) target = $region21
    $region20: #{tpu_custom_call.1} parent=1 // pred_region
      _
    $region21: #{tpu_custom_call.1} parent=1 // pred_fallthru
      _
    // Predicated region
    $region22: #{tpu_custom_call.1} parent=1 // pred_check
      _
    $region23: #{tpu_custom_call.1} parent=1 // pred_check_branch
      %34 = sbr.rel (0) target = $region25
    $region24: #{tpu_custom_call.1} parent=1 // pred_region
      _
    $region25: #{tpu_custom_call.1} parent=1 // pred_fallthru
      _
    // Predicated region
    $region26: #{tpu_custom_call.1} parent=1 // pred_check
      _
    $region27: #{tpu_custom_call.1} parent=1 // pred_check_branch
      %36 = sbr.rel (0) target = $region29
    $region28: #{tpu_custom_call.1} parent=1 // pred_region
      _
    $region29: #{tpu_custom_call.1} parent=1 // pred_fallthru
      _
    // Predicated region
    $region30: #{tpu_custom_call.1} parent=1 // pred_check
      _
    $region31: #{tpu_custom_call.1} parent=1 // pred_check_branch
      %38 = sbr.rel (0) target = $region33
    $region32: #{tpu_custom_call.1} parent=1 // pred_region
      _
    $region33: #{tpu_custom_call.1} parent=1 // pred_fallthru
      _
    // Predicated region
    $region34: #{tpu_custom_call.1} parent=1 // pred_check
      _
    $region35: #{tpu_custom_call.1} parent=1 // pred_check_branch
      %40 = sbr.rel (0) target = $region37
    $region36: #{tpu_custom_call.1} parent=1 // pred_region
      _
    $region37: #{tpu_custom_call.1} parent=1 // pred_fallthru
      _
    // Predicated region
    $region38: #{tpu_custom_call.1} parent=1 // pred_check
      _
    $region39: #{tpu_custom_call.1} parent=1 // pred_check_branch
      %42 = sbr.rel (0) target = $region41
    $region40: #{tpu_custom_call.1} parent=1 // pred_region
      _
    $region41: #{tpu_custom_call.1} parent=1 // pred_fallthru
      _
    // Predicated region
    $region42: #{tpu_custom_call.1} parent=1 // pred_check
      _
    $region43: #{tpu_custom_call.1} parent=1 // pred_check_branch
      %44 = sbr.rel (0) target = $region45
    $region44: #{tpu_custom_call.1} parent=1 // pred_region
      _
    $region45: #{tpu_custom_call.1} parent=1 // pred_fallthru
      _
    // Predicated region
    $region46: #{tpu_custom_call.1} parent=1 // pred_check
      _
    $region47: #{tpu_custom_call.1} parent=1 // pred_check_branch
      %46 = sbr.rel (0) target = $region49
    $region48: #{tpu_custom_call.1} parent=1 // pred_region
      _
    $region49: #{tpu_custom_call.1} parent=1 // pred_fallthru
      _
    // Predicated region
    $region50: #{tpu_custom_call.1} parent=1 // pred_check
      _
    $region51: #{tpu_custom_call.1} parent=1 // pred_check_branch
      %48 = sbr.rel (0) target = $region53
    $region52: #{tpu_custom_call.1} parent=1 // pred_region
      _
    $region53: #{tpu_custom_call.1} parent=1 // pred_fallthru
      _
    // Predicated region
    $region54: #{tpu_custom_call.1} parent=1 // pred_check
      _
    $region55: #{tpu_custom_call.1} parent=1 // pred_check_branch
      %50 = sbr.rel (0) target = $region57
    $region56: #{tpu_custom_call.1} parent=1 // pred_region
      _
    $region57: #{tpu_custom_call.1} parent=1 // pred_fallthru
      _
    // Predicated region
    $region58: #{tpu_custom_call.1} parent=1 // pred_check
      _
    $region59: #{tpu_custom_call.1} parent=1 // pred_check_branch
      %52 = sbr.rel (0) target = $region61
    $region60: #{tpu_custom_call.1} parent=1 // pred_region
      _
    $region61: #{tpu_custom_call.1} parent=1 // pred_fallthru
      _
    // Predicated region
    $region62: #{tpu_custom_call.1} parent=1 // pred_check
      _
    $region63: #{tpu_custom_call.1} parent=1 // pred_check_branch
      %54 = sbr.rel (0) target = $region65
    $region64: #{tpu_custom_call.1} parent=1 // pred_region
      %s56 = ssub.s32 16, 16
      %57 = vsyncadd [#allocation6], %s56
      %s59 = sshll.u32 %s15, 4
      %s60 = int_to_ptr.vmem [resolvable:$true] %s59
      %62 = dma.vmem_to_smem %s60, 16, [#allocation4], [#allocation6]
    $region65: #{tpu_custom_call.1} parent=1 // pred_fallthru
      _
    // Predicated region
    $region66: #{tpu_custom_call.1} parent=1 // pred_check
      _
    $region67: #{tpu_custom_call.1} parent=1 // pred_check_branch
      %64 = sbr.rel (0) target = $region69
    $region68: #{tpu_custom_call.1} parent=1 // pred_region
      %65 = dma.done [#allocation6], 16
    $region69: #{tpu_custom_call.1} parent=1 // pred_fallthru
      _
    %66 = sfence
    %v68 = vld [vmem:[%s0] sm:$0xff]
    %v69 = vld [vmem:[%s0 + $0x8] sm:$0xff]
    %70 = vst [vmem:[#allocation2] sm:$0xff] %v68
    %71 = vst [vmem:[#allocation2 + $0x8] sm:$0xff] %v69
    %s72 = sld [smem:[#allocation4]]
    %s73 = sld [smem:[#allocation4 + $0x1]]
    %s74 = sld [smem:[#allocation4 + $0x2]]
    %v75 = vld [vmem:[#allocation2] sm:$0xff]
    %v76 = vld [vmem:[#allocation2 + $0x8] sm:$0xff]
    %v77 = vlaneseq
    %v78 = vand.u32 %v77, 127
    %79 = vrot.lane.b32.xlu0 %v75, 1
    %v80 = vpop.permute.xlu0 %79
    %81 = vrot.lane.b32.xlu0 %v76, 1
    %v82 = vpop.permute.xlu0 %81
    %vm83 = vcmp.ge.s32.totalorder %v78, 1
    %v84 = vsel %vm83, %v80, 0.0
    %v85 = vsel %vm83, %v82, 0.0
    %v86 = vpack.c.bf16 %v85, %v84
    %87 = vst [vmem:[#allocation3] sm:$0xff] %v86
    %v88 = vld [vmem:[%s1] sm:$0xf]
    %v89 = vld [vmem:[%s1 + $0x4] sm:$0xf]
    %v90 = vld [vmem:[#allocation3] sm:$0xff]
    %v91 = vld [vmem:[%s2] sm:$0xf]
    %v92 = vld [vmem:[%s2 + $0x4] sm:$0xf]
    %v93 = vpack.c.bf16 %v76, %v75
    %v96 = vunpack.c.l.b16 %v91
    %v97 = vunpack.c.l.b16 %v92
    %v98 = vpack.c.b16 %v97, %v96
    %vm99 = vcmask 130048
    %v101 = vsel %vm99, %v98, 0
    %103 = vmatprep.subr.bf16.mxu0 0
    %104 = vmatpush1.bf16.msra.mxu0 %v93
    %105 = vmatprep.subr.bf16.mxu0 0
    %106 = vmatpush1.bf16.msra.mxu0 0
    %107 = vmatprep.subr.bf16.mxu0 0
    %108 = vmatpush1.bf16.msra.mxu0 0
    %109 = vmatprep.subr.bf16.mxu0 0
    %110 = vmatpush1.bf16.msra.mxu0 0
    %111 = vmatprep.subr.bf16.mxu0 0
    %112 = vmatpush1.bf16.msra.mxu0 0
    %113 = vmatprep.subr.bf16.mxu0 0
    %114 = vmatpush1.bf16.msra.mxu0 0
    %115 = vmatprep.subr.bf16.mxu0 0
    %116 = vmatpush1.bf16.msra.mxu0 0
    %117 = vmatprep.subr.bf16.mxu0 0
    %118 = vmatpush1.bf16.msra.mxu0 0
    %119 = vmatprep.subr.bf16.mxu0 0
    %120 = vmatpush1.bf16.msra.mxu0 0
    %121 = vmatprep.subr.bf16.mxu0 0
    %122 = vmatpush1.bf16.msra.mxu0 0
    %123 = vmatprep.subr.bf16.mxu0 0
    %124 = vmatpush1.bf16.msra.mxu0 0
    %125 = vmatprep.subr.bf16.mxu0 0
    %126 = vmatpush1.bf16.msra.mxu0 0
    %127 = vmatprep.subr.bf16.mxu0 0
    %128 = vmatpush1.bf16.msra.mxu0 0
    %129 = vmatprep.subr.bf16.mxu0 0
    %130 = vmatpush1.bf16.msra.mxu0 0
    %131 = vmatprep.subr.bf16.mxu0 0
    %132 = vmatpush1.bf16.msra.mxu0 0
    %133 = vmatprep.subr.bf16.mxu0 0
    %134 = vmatpush1.bf16.msra.mxu0 0
    %135 = vmatprep.mubr.bf16.mxu0 0
    %136 = vmatmul.mubr.bf16.gmra.mrb[0].mxu0 %v101
    %v137 = vpop.f32.mrb[0].mxu0
    %v138 = vadd.f32 0.0, %v137
    %v139 = vpop.f32.mrb[0].mxu0
    %v140 = vpop.f32.mrb[0].mxu0
    %v141 = vadd.f32 0.0, %v140
    %v142 = vpop.f32.mrb[0].mxu0
    %143 = vdwg.mxu0
    %v146 = vunpack.c.l.b16 %v88
    %v147 = vunpack.c.l.b16 %v89
    %v148 = vpack.c.b16 %v147, %v146
    %v150 = vsel %vm99, %v148, 0
    %152 = vmatprep.subr.bf16.mxu0 0
    %153 = vmatpush1.bf16.msra.mxu0 %v90
    %154 = vmatprep.subr.bf16.mxu0 0
    %155 = vmatpush1.bf16.msra.mxu0 0
    %156 = vmatprep.subr.bf16.mxu0 0
    %157 = vmatpush1.bf16.msra.mxu0 0
    %158 = vmatprep.subr.bf16.mxu0 0
    %159 = vmatpush1.bf16.msra.mxu0 0
    %160 = vmatprep.subr.bf16.mxu0 0
    %161 = vmatpush1.bf16.msra.mxu0 0
    %162 = vmatprep.subr.bf16.mxu0 0
    %163 = vmatpush1.bf16.msra.mxu0 0
    %164 = vmatprep.subr.bf16.mxu0 0
    %165 = vmatpush1.bf16.msra.mxu0 0
    %166 = vmatprep.subr.bf16.mxu0 0
    %167 = vmatpush1.bf16.msra.mxu0 0
    %168 = vmatprep.subr.bf16.mxu0 0
    %169 = vmatpush1.bf16.msra.mxu0 0
    %170 = vmatprep.subr.bf16.mxu0 0
    %171 = vmatpush1.bf16.msra.mxu0 0
    %172 = vmatprep.subr.bf16.mxu0 0
    %173 = vmatpush1.bf16.msra.mxu0 0
    %174 = vmatprep.subr.bf16.mxu0 0
    %175 = vmatpush1.bf16.msra.mxu0 0
    %176 = vmatprep.subr.bf16.mxu0 0
    %177 = vmatpush1.bf16.msra.mxu0 0
    %178 = vmatprep.subr.bf16.mxu0 0
    %179 = vmatpush1.bf16.msra.mxu0 0
    %180 = vmatprep.subr.bf16.mxu0 0
    %181 = vmatpush1.bf16.msra.mxu0 0
    %182 = vmatprep.subr.bf16.mxu0 0
    %183 = vmatpush1.bf16.msra.mxu0 0
    %184 = vmatprep.mubr.bf16.mxu0 0
    %185 = vmatmul.mubr.bf16.gmra.mrb[0].mxu0 %v150
    %v186 = vpop.f32.mrb[0].mxu0
    %v187 = vadd.f32 %v138, %v186
    %v188 = vpop.f32.mrb[0].mxu0
    %v189 = vpop.f32.mrb[0].mxu0
    %v190 = vadd.f32 %v141, %v189
    %v191 = vpop.f32.mrb[0].mxu0
    %192 = vdwg.mxu0
    %v193 = vld [vmem:[%s3] sm:$0xff]
    %v194 = vld [vmem:[%s3 + $0x8] sm:$0xff]
    %196 = vset.pattern.permute.xlu0 0
    %197 = vperm.xlu0 %196, %v193
    %v198 = vpop.permute.xlu0 %197
    %201 = vset.pattern.permute.xlu0 0
    %202 = vperm.xlu0 %201, %v194
    %v203 = vpop.permute.xlu0 %202
    %v205 = vadd.f32 %v187, %v198
    %v206 = vadd.f32 %v190, %v203
    %vm207 = vcmp.gt.f32.partialorder %v205, 0.0
    %vm208 = vcmp.gt.f32.partialorder %v206, 0.0
    %v209 = vstv %s72
    %v210 = vmul.f32 %v209, %v205
    %v211 = vmul.f32 %v209, %v206
    %v212 = vsel %vm207, %v205, %v210
    %v213 = vsel %vm208, %v206, %v211
    %214 = vrot.lane.b32.xlu0 %v212, 1
    %v215 = vpop.permute.xlu0 %214
    %216 = vrot.lane.b32.xlu0 %v213, 1
    %v217 = vpop.permute.xlu0 %216
    %v218 = vsel %vm83, %v215, 0.0
    %v219 = vsel %vm83, %v217, 0.0
    %v220 = vpack.c.bf16 %v219, %v218
    %221 = vst [vmem:[#allocation3] sm:$0xff] %v220
    %v222 = vld [vmem:[%s4] sm:$0xf]
    %v223 = vld [vmem:[%s4 + $0x4] sm:$0xf]
    %v224 = vld [vmem:[#allocation3] sm:$0xff]
    %v225 = vld [vmem:[%s5] sm:$0xf]
    %v226 = vld [vmem:[%s5 + $0x4] sm:$0xf]
    %v227 = vpack.c.bf16 %v213, %v212
    %v230 = vunpack.c.l.b16 %v225
    %v231 = vunpack.c.l.b16 %v226
    %v232 = vpack.c.b16 %v231, %v230
    %v234 = vsel %vm99, %v232, 0
    %236 = vmatprep.subr.bf16.mxu0 0
    %237 = vmatpush1.bf16.msra.mxu0 %v227
    %238 = vmatprep.subr.bf16.mxu0 0
    %239 = vmatpush1.bf16.msra.mxu0 0
    %240 = vmatprep.subr.bf16.mxu0 0
    %241 = vmatpush1.bf16.msra.mxu0 0
    %242 = vmatprep.subr.bf16.mxu0 0
    %243 = vmatpush1.bf16.msra.mxu0 0
    %244 = vmatprep.subr.bf16.mxu0 0
    %245 = vmatpush1.bf16.msra.mxu0 0
    %246 = vmatprep.subr.bf16.mxu0 0
    %247 = vmatpush1.bf16.msra.mxu0 0
    %248 = vmatprep.subr.bf16.mxu0 0
    %249 = vmatpush1.bf16.msra.mxu0 0
    %250 = vmatprep.subr.bf16.mxu0 0
    %251 = vmatpush1.bf16.msra.mxu0 0
    %252 = vmatprep.subr.bf16.mxu0 0
    %253 = vmatpush1.bf16.msra.mxu0 0
    %254 = vmatprep.subr.bf16.mxu0 0
    %255 = vmatpush1.bf16.msra.mxu0 0
    %256 = vmatprep.subr.bf16.mxu0 0
    %257 = vmatpush1.bf16.msra.mxu0 0
    %258 = vmatprep.subr.bf16.mxu0 0
    %259 = vmatpush1.bf16.msra.mxu0 0
    %260 = vmatprep.subr.bf16.mxu0 0
    %261 = vmatpush1.bf16.msra.mxu0 0
    %262 = vmatprep.subr.bf16.mxu0 0
    %263 = vmatpush1.bf16.msra.mxu0 0
    %264 = vmatprep.subr.bf16.mxu0 0
    %265 = vmatpush1.bf16.msra.mxu0 0
    %266 = vmatprep.subr.bf16.mxu0 0
    %267 = vmatpush1.bf16.msra.mxu0 0
    %268 = vmatprep.mubr.bf16.mxu0 0
    %269 = vmatmul.mubr.bf16.gmra.mrb[0].mxu0 %v234
    %v270 = vpop.f32.mrb[0].mxu0
    %v271 = vadd.f32 0.0, %v270
    %v272 = vpop.f32.mrb[0].mxu0
    %v273 = vpop.f32.mrb[0].mxu0
    %v274 = vadd.f32 0.0, %v273
    %v275 = vpop.f32.mrb[0].mxu0
    %276 = vdwg.mxu0
    %v279 = vunpack.c.l.b16 %v222
    %v280 = vunpack.c.l.b16 %v223
    %v281 = vpack.c.b16 %v280, %v279
    %v283 = vsel %vm99, %v281, 0
    %285 = vmatprep.subr.bf16.mxu0 0
    %286 = vmatpush1.bf16.msra.mxu0 %v224
    %287 = vmatprep.subr.bf16.mxu0 0
    %288 = vmatpush1.bf16.msra.mxu0 0
    %289 = vmatprep.subr.bf16.mxu0 0
    %290 = vmatpush1.bf16.msra.mxu0 0
    %291 = vmatprep.subr.bf16.mxu0 0
    %292 = vmatpush1.bf16.msra.mxu0 0
    %293 = vmatprep.subr.bf16.mxu0 0
    %294 = vmatpush1.bf16.msra.mxu0 0
    %295 = vmatprep.subr.bf16.mxu0 0
    %296 = vmatpush1.bf16.msra.mxu0 0
    %297 = vmatprep.subr.bf16.mxu0 0
    %298 = vmatpush1.bf16.msra.mxu0 0
    %299 = vmatprep.subr.bf16.mxu0 0
    %300 = vmatpush1.bf16.msra.mxu0 0
    %301 = vmatprep.subr.bf16.mxu0 0
    %302 = vmatpush1.bf16.msra.mxu0 0
    %303 = vmatprep.subr.bf16.mxu0 0
    %304 = vmatpush1.bf16.msra.mxu0 0
    %305 = vmatprep.subr.bf16.mxu0 0
    %306 = vmatpush1.bf16.msra.mxu0 0
    %307 = vmatprep.subr.bf16.mxu0 0
    %308 = vmatpush1.bf16.msra.mxu0 0
    %309 = vmatprep.subr.bf16.mxu0 0
    %310 = vmatpush1.bf16.msra.mxu0 0
    %311 = vmatprep.subr.bf16.mxu0 0
    %312 = vmatpush1.bf16.msra.mxu0 0
    %313 = vmatprep.subr.bf16.mxu0 0
    %314 = vmatpush1.bf16.msra.mxu0 0
    %315 = vmatprep.subr.bf16.mxu0 0
    %316 = vmatpush1.bf16.msra.mxu0 0
    %317 = vmatprep.mubr.bf16.mxu0 0
    %318 = vmatmul.mubr.bf16.gmra.mrb[0].mxu0 %v283
    %v319 = vpop.f32.mrb[0].mxu0
    %v320 = vadd.f32 %v271, %v319
    %v321 = vpop.f32.mrb[0].mxu0
    %v322 = vpop.f32.mrb[0].mxu0
    %v323 = vadd.f32 %v274, %v322
    %v324 = vpop.f32.mrb[0].mxu0
    %325 = vdwg.mxu0
    %v326 = vld [vmem:[%s6] sm:$0xff]
    %v327 = vld [vmem:[%s6 + $0x8] sm:$0xff]
    %329 = vset.pattern.permute.xlu0 0
    %330 = vperm.xlu0 %329, %v326
    %v331 = vpop.permute.xlu0 %330
    %334 = vset.pattern.permute.xlu0 0
    %335 = vperm.xlu0 %334, %v327
    %v336 = vpop.permute.xlu0 %335
    %v338 = vadd.f32 %v320, %v331
    %v339 = vadd.f32 %v323, %v336
    %vm340 = vcmp.gt.f32.partialorder %v338, 0.0
    %vm341 = vcmp.gt.f32.partialorder %v339, 0.0
    %v342 = vstv %s73
    %v343 = vmul.f32 %v342, %v338
    %v344 = vmul.f32 %v342, %v339
    %v345 = vsel %vm340, %v338, %v343
    %v346 = vsel %vm341, %v339, %v344
    %v347 = vld [vmem:[%s7] sm:$0xf]
    %v348 = vld [vmem:[%s7 + $0x4] sm:$0xf]
    %v349 = vld [vmem:[#allocation2] sm:$0xff]
    %v350 = vld [vmem:[#allocation2 + $0x8] sm:$0xff]
    %v351 = vpack.c.bf16 %v350, %v349
    %v352 = vld [vmem:[%s8] sm:$0xff]
    %v353 = vld [vmem:[%s8 + $0x8] sm:$0xff]
    %355 = vset.pattern.permute.xlu0 0
    %356 = vperm.xlu0 %355, %v352
    %v357 = vpop.permute.xlu0 %356
    %360 = vset.pattern.permute.xlu0 0
    %361 = vperm.xlu0 %360, %v353
    %v362 = vpop.permute.xlu0 %361
    %v366 = vunpack.c.l.b16 %v347
    %v367 = vunpack.c.l.b16 %v348
    %v368 = vpack.c.b16 %v367, %v366
    %v370 = vsel %vm99, %v368, 0
    %372 = vmatprep.subr.bf16.mxu0 0
    %373 = vmatpush1.bf16.msra.mxu0 %v351
    %374 = vmatprep.subr.bf16.mxu0 0
    %375 = vmatpush1.bf16.msra.mxu0 0
    %376 = vmatprep.subr.bf16.mxu0 0
    %377 = vmatpush1.bf16.msra.mxu0 0
    %378 = vmatprep.subr.bf16.mxu0 0
    %379 = vmatpush1.bf16.msra.mxu0 0
    %380 = vmatprep.subr.bf16.mxu0 0
    %381 = vmatpush1.bf16.msra.mxu0 0
    %382 = vmatprep.subr.bf16.mxu0 0
    %383 = vmatpush1.bf16.msra.mxu0 0
    %384 = vmatprep.subr.bf16.mxu0 0
    %385 = vmatpush1.bf16.msra.mxu0 0
    %386 = vmatprep.subr.bf16.mxu0 0
    %387 = vmatpush1.bf16.msra.mxu0 0
    %388 = vmatprep.subr.bf16.mxu0 0
    %389 = vmatpush1.bf16.msra.mxu0 0
    %390 = vmatprep.subr.bf16.mxu0 0
    %391 = vmatpush1.bf16.msra.mxu0 0
    %392 = vmatprep.subr.bf16.mxu0 0
    %393 = vmatpush1.bf16.msra.mxu0 0
    %394 = vmatprep.subr.bf16.mxu0 0
    %395 = vmatpush1.bf16.msra.mxu0 0
    %396 = vmatprep.subr.bf16.mxu0 0
    %397 = vmatpush1.bf16.msra.mxu0 0
    %398 = vmatprep.subr.bf16.mxu0 0
    %399 = vmatpush1.bf16.msra.mxu0 0
    %400 = vmatprep.subr.bf16.mxu0 0
    %401 = vmatpush1.bf16.msra.mxu0 0
    %402 = vmatprep.subr.bf16.mxu0 0
    %403 = vmatpush1.bf16.msra.mxu0 0
    %404 = vmatprep.mubr.bf16.mxu0 0
    %405 = vmatmul.mubr.bf16.gmra.mrb[0].mxu0 %v370
    %v406 = vpop.f32.mrb[0].mxu0
    %v407 = vadd.f32 %v357, %v406
    %v408 = vpop.f32.mrb[0].mxu0
    %v409 = vpop.f32.mrb[0].mxu0
    %v410 = vadd.f32 %v362, %v409
    %v411 = vpop.f32.mrb[0].mxu0
    %412 = vdwg.mxu0
    %v413 = vadd.f32 %v345, %v407
    %v414 = vadd.f32 %v346, %v410
    %vm415 = vcmp.gt.f32.partialorder %v413, 0.0
    %vm416 = vcmp.gt.f32.partialorder %v414, 0.0
    %v417 = vstv %s74
    %v418 = vmul.f32 %v417, %v413
    %v419 = vmul.f32 %v417, %v414
    %v420 = vsel %vm415, %v413, %v418
    %v421 = vsel %vm416, %v414, %v419
    %422 = vst [vmem:[#allocation2] sm:$0xff] %v420
    %423 = vst [vmem:[#allocation2 + $0x8] sm:$0xff] %v421
    %s424 = sld [smem:[#allocation4 + $0x3]]
    %s425 = sld [smem:[#allocation4 + $0x4]]
    %s426 = sld [smem:[#allocation4 + $0x5]]
    %v427 = vld [vmem:[#allocation2] sm:$0xff]
    %v428 = vld [vmem:[#allocation2 + $0x8] sm:$0xff]
    %429 = vrot.lane.b32.xlu0 %v427, 2
    %v430 = vpop.permute.xlu0 %429
    %431 = vrot.lane.b32.xlu0 %v428, 2
    %v432 = vpop.permute.xlu0 %431
    %vm433 = vcmp.ge.s32.totalorder %v78, 2
    %v434 = vsel %vm433, %v430, 0.0
    %v435 = vsel %vm433, %v432, 0.0
    %v436 = vpack.c.bf16 %v435, %v434
    %437 = vst [vmem:[#allocation3] sm:$0xff] %v436
    %v438 = vld [vmem:[%s9] sm:$0xf]
    %v439 = vld [vmem:[%s9 + $0x4] sm:$0xf]
    %v440 = vld [vmem:[#allocation3] sm:$0xff]
    %v441 = vld [vmem:[%s10] sm:$0xf]
    %v442 = vld [vmem:[%s10 + $0x4] sm:$0xf]
    %v443 = vpack.c.bf16 %v428, %v427
    %v446 = vunpack.c.l.b16 %v441
    %v447 = vunpack.c.l.b16 %v442
    %v448 = vpack.c.b16 %v447, %v446
    %v450 = vsel %vm99, %v448, 0
    %452 = vmatprep.subr.bf16.mxu0 0
    %453 = vmatpush1.bf16.msra.mxu0 %v443
    %454 = vmatprep.subr.bf16.mxu0 0
    %455 = vmatpush1.bf16.msra.mxu0 0
    %456 = vmatprep.subr.bf16.mxu0 0
    %457 = vmatpush1.bf16.msra.mxu0 0
    %458 = vmatprep.subr.bf16.mxu0 0
    %459 = vmatpush1.bf16.msra.mxu0 0
    %460 = vmatprep.subr.bf16.mxu0 0
    %461 = vmatpush1.bf16.msra.mxu0 0
    %462 = vmatprep.subr.bf16.mxu0 0
    %463 = vmatpush1.bf16.msra.mxu0 0
    %464 = vmatprep.subr.bf16.mxu0 0
    %465 = vmatpush1.bf16.msra.mxu0 0
    %466 = vmatprep.subr.bf16.mxu0 0
    %467 = vmatpush1.bf16.msra.mxu0 0
    %468 = vmatprep.subr.bf16.mxu0 0
    %469 = vmatpush1.bf16.msra.mxu0 0
    %470 = vmatprep.subr.bf16.mxu0 0
    %471 = vmatpush1.bf16.msra.mxu0 0
    %472 = vmatprep.subr.bf16.mxu0 0
    %473 = vmatpush1.bf16.msra.mxu0 0
    %474 = vmatprep.subr.bf16.mxu0 0
    %475 = vmatpush1.bf16.msra.mxu0 0
    %476 = vmatprep.subr.bf16.mxu0 0
    %477 = vmatpush1.bf16.msra.mxu0 0
    %478 = vmatprep.subr.bf16.mxu0 0
    %479 = vmatpush1.bf16.msra.mxu0 0
    %480 = vmatprep.subr.bf16.mxu0 0
    %481 = vmatpush1.bf16.msra.mxu0 0
    %482 = vmatprep.subr.bf16.mxu0 0
    %483 = vmatpush1.bf16.msra.mxu0 0
    %484 = vmatprep.mubr.bf16.mxu0 0
    %485 = vmatmul.mubr.bf16.gmra.mrb[0].mxu0 %v450
    %v486 = vpop.f32.mrb[0].mxu0
    %v487 = vadd.f32 0.0, %v486
    %v488 = vpop.f32.mrb[0].mxu0
    %v489 = vpop.f32.mrb[0].mxu0
    %v490 = vadd.f32 0.0, %v489
    %v491 = vpop.f32.mrb[0].mxu0
    %492 = vdwg.mxu0
    %v495 = vunpack.c.l.b16 %v438
    %v496 = vunpack.c.l.b16 %v439
    %v497 = vpack.c.b16 %v496, %v495
    %v499 = vsel %vm99, %v497, 0
    %501 = vmatprep.subr.bf16.mxu0 0
    %502 = vmatpush1.bf16.msra.mxu0 %v440
    %503 = vmatprep.subr.bf16.mxu0 0
    %504 = vmatpush1.bf16.msra.mxu0 0
    %505 = vmatprep.subr.bf16.mxu0 0
    %506 = vmatpush1.bf16.msra.mxu0 0
    %507 = vmatprep.subr.bf16.mxu0 0
    %508 = vmatpush1.bf16.msra.mxu0 0
    %509 = vmatprep.subr.bf16.mxu0 0
    %510 = vmatpush1.bf16.msra.mxu0 0
    %511 = vmatprep.subr.bf16.mxu0 0
    %512 = vmatpush1.bf16.msra.mxu0 0
    %513 = vmatprep.subr.bf16.mxu0 0
    %514 = vmatpush1.bf16.msra.mxu0 0
    %515 = vmatprep.subr.bf16.mxu0 0
    %516 = vmatpush1.bf16.msra.mxu0 0
    %517 = vmatprep.subr.bf16.mxu0 0
    %518 = vmatpush1.bf16.msra.mxu0 0
    %519 = vmatprep.subr.bf16.mxu0 0
    %520 = vmatpush1.bf16.msra.mxu0 0
    %521 = vmatprep.subr.bf16.mxu0 0
    %522 = vmatpush1.bf16.msra.mxu0 0
    %523 = vmatprep.subr.bf16.mxu0 0
    %524 = vmatpush1.bf16.msra.mxu0 0
    %525 = vmatprep.subr.bf16.mxu0 0
    %526 = vmatpush1.bf16.msra.mxu0 0
    %527 = vmatprep.subr.bf16.mxu0 0
    %528 = vmatpush1.bf16.msra.mxu0 0
    %529 = vmatprep.subr.bf16.mxu0 0
    %530 = vmatpush1.bf16.msra.mxu0 0
    %531 = vmatprep.subr.bf16.mxu0 0
    %532 = vmatpush1.bf16.msra.mxu0 0
    %533 = vmatprep.mubr.bf16.mxu0 0
    %534 = vmatmul.mubr.bf16.gmra.mrb[0].mxu0 %v499
    %v535 = vpop.f32.mrb[0].mxu0
    %v536 = vadd.f32 %v487, %v535
    %v537 = vpop.f32.mrb[0].mxu0
    %v538 = vpop.f32.mrb[0].mxu0
    %v539 = vadd.f32 %v490, %v538
    %v540 = vpop.f32.mrb[0].mxu0
    %541 = vdwg.mxu0
    %v542 = vld [vmem:[%s11] sm:$0xff]
    %v543 = vld [vmem:[%s11 + $0x8] sm:$0xff]
    %545 = vset.pattern.permute.xlu0 0
    %546 = vperm.xlu0 %545, %v542
    %v547 = vpop.permute.xlu0 %546
    %550 = vset.pattern.permute.xlu0 0
    %551 = vperm.xlu0 %550, %v543
    %v552 = vpop.permute.xlu0 %551
    %v554 = vadd.f32 %v536, %v547
    %v555 = vadd.f32 %v539, %v552
    %vm556 = vcmp.gt.f32.partialorder %v554, 0.0
    %vm557 = vcmp.gt.f32.partialorder %v555, 0.0
    %v558 = vstv %s424
    %v559 = vmul.f32 %v558, %v554
    %v560 = vmul.f32 %v558, %v555
    %v561 = vsel %vm556, %v554, %v559
    %v562 = vsel %vm557, %v555, %v560
    %563 = vrot.lane.b32.xlu0 %v561, 2
    %v564 = vpop.permute.xlu0 %563
    %565 = vrot.lane.b32.xlu0 %v562, 2
    %v566 = vpop.permute.xlu0 %565
    %v567 = vsel %vm433, %v564, 0.0
    %v568 = vsel %vm433, %v566, 0.0
    %v569 = vpack.c.bf16 %v568, %v567
    %570 = vst [vmem:[#allocation3] sm:$0xff] %v569
    %v571 = vld [vmem:[%s12] sm:$0xf]
    %v572 = vld [vmem:[%s12 + $0x4] sm:$0xf]
    %v573 = vld [vmem:[#allocation3] sm:$0xff]
    %v574 = vld [vmem:[%s13] sm:$0xf]
    %v575 = vld [vmem:[%s13 + $0x4] sm:$0xf]
    %v576 = vpack.c.bf16 %v562, %v561
    %v579 = vunpack.c.l.b16 %v574
    %v580 = vunpack.c.l.b16 %v575
    %v581 = vpack.c.b16 %v580, %v579
    %v583 = vsel %vm99, %v581, 0
    %585 = vmatprep.subr.bf16.mxu0 0
    %586 = vmatpush1.bf16.msra.mxu0 %v576
    %587 = vmatprep.subr.bf16.mxu0 0
    %588 = vmatpush1.bf16.msra.mxu0 0
    %589 = vmatprep.subr.bf16.mxu0 0
    %590 = vmatpush1.bf16.msra.mxu0 0
    %591 = vmatprep.subr.bf16.mxu0 0
    %592 = vmatpush1.bf16.msra.mxu0 0
    %593 = vmatprep.subr.bf16.mxu0 0
    %594 = vmatpush1.bf16.msra.mxu0 0
    %595 = vmatprep.subr.bf16.mxu0 0
    %596 = vmatpush1.bf16.msra.mxu0 0
    %597 = vmatprep.subr.bf16.mxu0 0
    %598 = vmatpush1.bf16.msra.mxu0 0
    %599 = vmatprep.subr.bf16.mxu0 0
    %600 = vmatpush1.bf16.msra.mxu0 0
    %601 = vmatprep.subr.bf16.mxu0 0
    %602 = vmatpush1.bf16.msra.mxu0 0
    %603 = vmatprep.subr.bf16.mxu0 0
    %604 = vmatpush1.bf16.msra.mxu0 0
    %605 = vmatprep.subr.bf16.mxu0 0
    %606 = vmatpush1.bf16.msra.mxu0 0
    %607 = vmatprep.subr.bf16.mxu0 0
    %608 = vmatpush1.bf16.msra.mxu0 0
    %609 = vmatprep.subr.bf16.mxu0 0
    %610 = vmatpush1.bf16.msra.mxu0 0
    %611 = vmatprep.subr.bf16.mxu0 0
    %612 = vmatpush1.bf16.msra.mxu0 0
    %613 = vmatprep.subr.bf16.mxu0 0
    %614 = vmatpush1.bf16.msra.mxu0 0
    %615 = vmatprep.subr.bf16.mxu0 0
    %616 = vmatpush1.bf16.msra.mxu0 0
    %617 = vmatprep.mubr.bf16.mxu0 0
    %618 = vmatmul.mubr.bf16.gmra.mrb[0].mxu0 %v583
    %v619 = vpop.f32.mrb[0].mxu0
    %v620 = vadd.f32 0.0, %v619
    %v621 = vpop.f32.mrb[0].mxu0
    %v622 = vpop.f32.mrb[0].mxu0
    %v623 = vadd.f32 0.0, %v622
    %v624 = vpop.f32.mrb[0].mxu0
    %625 = vdwg.mxu0
    %v628 = vunpack.c.l.b16 %v571
    %v629 = vunpack.c.l.b16 %v572
    %v630 = vpack.c.b16 %v629, %v628
    %v632 = vsel %vm99, %v630, 0
    %634 = vmatprep.subr.bf16.mxu0 0
    %635 = vmatpush1.bf16.msra.mxu0 %v573
    %636 = vmatprep.subr.bf16.mxu0 0
    %637 = vmatpush1.bf16.msra.mxu0 0
    %638 = vmatprep.subr.bf16.mxu0 0
    %639 = vmatpush1.bf16.msra.mxu0 0
    %640 = vmatprep.subr.bf16.mxu0 0
    %641 = vmatpush1.bf16.msra.mxu0 0
    %642 = vmatprep.subr.bf16.mxu0 0
    %643 = vmatpush1.bf16.msra.mxu0 0
    %644 = vmatprep.subr.bf16.mxu0 0
    %645 = vmatpush1.bf16.msra.mxu0 0
    %646 = vmatprep.subr.bf16.mxu0 0
    %647 = vmatpush1.bf16.msra.mxu0 0
    %648 = vmatprep.subr.bf16.mxu0 0
    %649 = vmatpush1.bf16.msra.mxu0 0
    %650 = vmatprep.subr.bf16.mxu0 0
    %651 = vmatpush1.bf16.msra.mxu0 0
    %652 = vmatprep.subr.bf16.mxu0 0
    %653 = vmatpush1.bf16.msra.mxu0 0
    %654 = vmatprep.subr.bf16.mxu0 0
    %655 = vmatpush1.bf16.msra.mxu0 0
    %656 = vmatprep.subr.bf16.mxu0 0
    %657 = vmatpush1.bf16.msra.mxu0 0
    %658 = vmatprep.subr.bf16.mxu0 0
    %659 = vmatpush1.bf16.msra.mxu0 0
    %660 = vmatprep.subr.bf16.mxu0 0
    %661 = vmatpush1.bf16.msra.mxu0 0
    %662 = vmatprep.subr.bf16.mxu0 0
    %663 = vmatpush1.bf16.msra.mxu0 0
    %664 = vmatprep.subr.bf16.mxu0 0
    %665 = vmatpush1.bf16.msra.mxu0 0
    %666 = vmatprep.mubr.bf16.mxu0 0
    %667 = vmatmul.mubr.bf16.gmra.mrb[0].mxu0 %v632
    %v668 = vpop.f32.mrb[0].mxu0
    %v669 = vadd.f32 %v620, %v668
    %v670 = vpop.f32.mrb[0].mxu0
    %v671 = vpop.f32.mrb[0].mxu0
    %v672 = vadd.f32 %v623, %v671
    %v673 = vpop.f32.mrb[0].mxu0
    %674 = vdwg.mxu0
    %v675 = vld [vmem:[%s14] sm:$0xff]
    %v676 = vld [vmem:[%s14 + $0x8] sm:$0xff]
    %678 = vset.pattern.permute.xlu0 0
    %679 = vperm.xlu0 %678, %v675
    %v680 = vpop.permute.xlu0 %679
    %683 = vset.pattern.permute.xlu0 0
    %684 = vperm.xlu0 %683, %v676
    %v685 = vpop.permute.xlu0 %684
    %v687 = vadd.f32 %v669, %v680
    %v688 = vadd.f32 %v672, %v685
    %vm689 = vcmp.gt.f32.partialorder %v687, 0.0
    %vm690 = vcmp.gt.f32.partialorder %v688, 0.0
    %v691 = vstv %s425
    %v692 = vmul.f32 %v691, %v687
    %v693 = vmul.f32 %v691, %v688
    %v694 = vsel %vm689, %v687, %v692
    %v695 = vsel %vm690, %v688, %v693
    %v696 = vld [vmem:[#allocation2] sm:$0xff]
    %v697 = vld [vmem:[#allocation2 + $0x8] sm:$0xff]
    %v698 = vadd.f32 %v694, %v696
    %v699 = vadd.f32 %v695, %v697
    %vm700 = vcmp.gt.f32.partialorder %v698, 0.0
    %vm701 = vcmp.gt.f32.partialorder %v699, 0.0
    %v702 = vstv %s426
    %v703 = vmul.f32 %v702, %v698
    %v704 = vmul.f32 %v702, %v699
    %v705 = vsel %vm700, %v698, %v703
    %v706 = vsel %vm701, %v699, %v704
    %707 = vst [vmem:[#allocation7] sm:$0xff] %v705
    %708 = vst [vmem:[#allocation7 + $0x8] sm:$0xff] %v706
    %s709 = scalar_lea.vmem %s0, 16
    %v710 = vld [vmem:[%s709] sm:$0xff]
    %v711 = vld [vmem:[%s709 + $0x8] sm:$0xff]
    %712 = vst [vmem:[#allocation2] sm:$0xff] %v710
    %713 = vst [vmem:[#allocation2 + $0x8] sm:$0xff] %v711
    %s714 = sld [smem:[#allocation4]]
    %s715 = sld [smem:[#allocation4 + $0x1]]
    %s716 = sld [smem:[#allocation4 + $0x2]]
    %v717 = vld [vmem:[#allocation2] sm:$0xff]
    %v718 = vld [vmem:[#allocation2 + $0x8] sm:$0xff]
    %719 = vrot.lane.b32.xlu0 %v717, 1
    %v720 = vpop.permute.xlu0 %719
    %721 = vrot.lane.b32.xlu0 %v718, 1
    %v722 = vpop.permute.xlu0 %721
    %v723 = vsel %vm83, %v720, 0.0
    %v724 = vsel %vm83, %v722, 0.0
    %v725 = vpack.c.bf16 %v724, %v723
    %726 = vst [vmem:[#allocation3] sm:$0xff] %v725
    %v727 = vld [vmem:[%s1] sm:$0xf]
    %v728 = vld [vmem:[%s1 + $0x4] sm:$0xf]
    %v729 = vld [vmem:[#allocation3] sm:$0xff]
    %v730 = vld [vmem:[%s2] sm:$0xf]
    %v731 = vld [vmem:[%s2 + $0x4] sm:$0xf]
    %v732 = vpack.c.bf16 %v718, %v717
    %v735 = vunpack.c.l.b16 %v730
    %v736 = vunpack.c.l.b16 %v731
    %v737 = vpack.c.b16 %v736, %v735
    %v739 = vsel %vm99, %v737, 0
    %741 = vmatprep.subr.bf16.mxu0 0
    %742 = vmatpush1.bf16.msra.mxu0 %v732
    %743 = vmatprep.subr.bf16.mxu0 0
    %744 = vmatpush1.bf16.msra.mxu0 0
    %745 = vmatprep.subr.bf16.mxu0 0
    %746 = vmatpush1.bf16.msra.mxu0 0
    %747 = vmatprep.subr.bf16.mxu0 0
    %748 = vmatpush1.bf16.msra.mxu0 0
    %749 = vmatprep.subr.bf16.mxu0 0
    %750 = vmatpush1.bf16.msra.mxu0 0
    %751 = vmatprep.subr.bf16.mxu0 0
    %752 = vmatpush1.bf16.msra.mxu0 0
    %753 = vmatprep.subr.bf16.mxu0 0
    %754 = vmatpush1.bf16.msra.mxu0 0
    %755 = vmatprep.subr.bf16.mxu0 0
    %756 = vmatpush1.bf16.msra.mxu0 0
    %757 = vmatprep.subr.bf16.mxu0 0
    %758 = vmatpush1.bf16.msra.mxu0 0
    %759 = vmatprep.subr.bf16.mxu0 0
    %760 = vmatpush1.bf16.msra.mxu0 0
    %761 = vmatprep.subr.bf16.mxu0 0
    %762 = vmatpush1.bf16.msra.mxu0 0
    %763 = vmatprep.subr.bf16.mxu0 0
    %764 = vmatpush1.bf16.msra.mxu0 0
    %765 = vmatprep.subr.bf16.mxu0 0
    %766 = vmatpush1.bf16.msra.mxu0 0
    %767 = vmatprep.subr.bf16.mxu0 0
    %768 = vmatpush1.bf16.msra.mxu0 0
    %769 = vmatprep.subr.bf16.mxu0 0
    %770 = vmatpush1.bf16.msra.mxu0 0
    %771 = vmatprep.subr.bf16.mxu0 0
    %772 = vmatpush1.bf16.msra.mxu0 0
    %773 = vmatprep.mubr.bf16.mxu0 0
    %774 = vmatmul.mubr.bf16.gmra.mrb[0].mxu0 %v739
    %v775 = vpop.f32.mrb[0].mxu0
    %v776 = vadd.f32 0.0, %v775
    %v777 = vpop.f32.mrb[0].mxu0
    %v778 = vpop.f32.mrb[0].mxu0
    %v779 = vadd.f32 0.0, %v778
    %v780 = vpop.f32.mrb[0].mxu0
    %781 = vdwg.mxu0
    %v784 = vunpack.c.l.b16 %v727
    %v785 = vunpack.c.l.b16 %v728
    %v786 = vpack.c.b16 %v785, %v784
    %v788 = vsel %vm99, %v786, 0
    %790 = vmatprep.subr.bf16.mxu0 0
    %791 = vmatpush1.bf16.msra.mxu0 %v729
    %792 = vmatprep.subr.bf16.mxu0 0
    %793 = vmatpush1.bf16.msra.mxu0 0
    %794 = vmatprep.subr.bf16.mxu0 0
    %795 = vmatpush1.bf16.msra.mxu0 0
    %796 = vmatprep.subr.bf16.mxu0 0
    %797 = vmatpush1.bf16.msra.mxu0 0
    %798 = vmatprep.subr.bf16.mxu0 0
    %799 = vmatpush1.bf16.msra.mxu0 0
    %800 = vmatprep.subr.bf16.mxu0 0
    %801 = vmatpush1.bf16.msra.mxu0 0
    %802 = vmatprep.subr.bf16.mxu0 0
    %803 = vmatpush1.bf16.msra.mxu0 0
    %804 = vmatprep.subr.bf16.mxu0 0
    %805 = vmatpush1.bf16.msra.mxu0 0
    %806 = vmatprep.subr.bf16.mxu0 0
    %807 = vmatpush1.bf16.msra.mxu0 0
    %808 = vmatprep.subr.bf16.mxu0 0
    %809 = vmatpush1.bf16.msra.mxu0 0
    %810 = vmatprep.subr.bf16.mxu0 0
    %811 = vmatpush1.bf16.msra.mxu0 0
    %812 = vmatprep.subr.bf16.mxu0 0
    %813 = vmatpush1.bf16.msra.mxu0 0
    %814 = vmatprep.subr.bf16.mxu0 0
    %815 = vmatpush1.bf16.msra.mxu0 0
    %816 = vmatprep.subr.bf16.mxu0 0
    %817 = vmatpush1.bf16.msra.mxu0 0
    %818 = vmatprep.subr.bf16.mxu0 0
    %819 = vmatpush1.bf16.msra.mxu0 0
    %820 = vmatprep.subr.bf16.mxu0 0
    %821 = vmatpush1.bf16.msra.mxu0 0
    %822 = vmatprep.mubr.bf16.mxu0 0
    %823 = vmatmul.mubr.bf16.gmra.mrb[0].mxu0 %v788
    %v824 = vpop.f32.mrb[0].mxu0
    %v825 = vadd.f32 %v776, %v824
    %v826 = vpop.f32.mrb[0].mxu0
    %v827 = vpop.f32.mrb[0].mxu0
    %v828 = vadd.f32 %v779, %v827
    %v829 = vpop.f32.mrb[0].mxu0
    %830 = vdwg.mxu0
    %v831 = vld [vmem:[%s3] sm:$0xff]
    %v832 = vld [vmem:[%s3 + $0x8] sm:$0xff]
    %834 = vset.pattern.permute.xlu0 0
    %835 = vperm.xlu0 %834, %v831
    %v836 = vpop.permute.xlu0 %835
    %839 = vset.pattern.permute.xlu0 0
    %840 = vperm.xlu0 %839, %v832
    %v841 = vpop.permute.xlu0 %840
    %v843 = vadd.f32 %v825, %v836
    %v844 = vadd.f32 %v828, %v841
    %vm845 = vcmp.gt.f32.partialorder %v843, 0.0
    %vm846 = vcmp.gt.f32.partialorder %v844, 0.0
    %v847 = vstv %s714
    %v848 = vmul.f32 %v847, %v843
    %v849 = vmul.f32 %v847, %v844
    %v850 = vsel %vm845, %v843, %v848
    %v851 = vsel %vm846, %v844, %v849
    %852 = vrot.lane.b32.xlu0 %v850, 1
    %v853 = vpop.permute.xlu0 %852
    %854 = vrot.lane.b32.xlu0 %v851, 1
    %v855 = vpop.permute.xlu0 %854
    %v856 = vsel %vm83, %v853, 0.0
    %v857 = vsel %vm83, %v855, 0.0
    %v858 = vpack.c.bf16 %v857, %v856
    %859 = vst [vmem:[#allocation3] sm:$0xff] %v858
    %v860 = vld [vmem:[%s4] sm:$0xf]
    %v861 = vld [vmem:[%s4 + $0x4] sm:$0xf]
    %v862 = vld [vmem:[#allocation3] sm:$0xff]
    %v863 = vld [vmem:[%s5] sm:$0xf]
    %v864 = vld [vmem:[%s5 + $0x4] sm:$0xf]
    %v865 = vpack.c.bf16 %v851, %v850
    %v868 = vunpack.c.l.b16 %v863
    %v869 = vunpack.c.l.b16 %v864
    %v870 = vpack.c.b16 %v869, %v868
    %v872 = vsel %vm99, %v870, 0
    %874 = vmatprep.subr.bf16.mxu0 0
    %875 = vmatpush1.bf16.msra.mxu0 %v865
    %876 = vmatprep.subr.bf16.mxu0 0
    %877 = vmatpush1.bf16.msra.mxu0 0
    %878 = vmatprep.subr.bf16.mxu0 0
    %879 = vmatpush1.bf16.msra.mxu0 0
    %880 = vmatprep.subr.bf16.mxu0 0
    %881 = vmatpush1.bf16.msra.mxu0 0
    %882 = vmatprep.subr.bf16.mxu0 0
    %883 = vmatpush1.bf16.msra.mxu0 0
    %884 = vmatprep.subr.bf16.mxu0 0
    %885 = vmatpush1.bf16.msra.mxu0 0
    %886 = vmatprep.subr.bf16.mxu0 0
    %887 = vmatpush1.bf16.msra.mxu0 0
    %888 = vmatprep.subr.bf16.mxu0 0
    %889 = vmatpush1.bf16.msra.mxu0 0
    %890 = vmatprep.subr.bf16.mxu0 0
    %891 = vmatpush1.bf16.msra.mxu0 0
    %892 = vmatprep.subr.bf16.mxu0 0
    %893 = vmatpush1.bf16.msra.mxu0 0
    %894 = vmatprep.subr.bf16.mxu0 0
    %895 = vmatpush1.bf16.msra.mxu0 0
    %896 = vmatprep.subr.bf16.mxu0 0
    %897 = vmatpush1.bf16.msra.mxu0 0
    %898 = vmatprep.subr.bf16.mxu0 0
    %899 = vmatpush1.bf16.msra.mxu0 0
    %900 = vmatprep.subr.bf16.mxu0 0
    %901 = vmatpush1.bf16.msra.mxu0 0
    %902 = vmatprep.subr.bf16.mxu0 0
    %903 = vmatpush1.bf16.msra.mxu0 0
    %904 = vmatprep.subr.bf16.mxu0 0
    %905 = vmatpush1.bf16.msra.mxu0 0
    %906 = vmatprep.mubr.bf16.mxu0 0
    %907 = vmatmul.mubr.bf16.gmra.mrb[0].mxu0 %v872
    %v908 = vpop.f32.mrb[0].mxu0
    %v909 = vadd.f32 0.0, %v908
    %v910 = vpop.f32.mrb[0].mxu0
    %v911 = vpop.f32.mrb[0].mxu0
    %v912 = vadd.f32 0.0, %v911
    %v913 = vpop.f32.mrb[0].mxu0
    %914 = vdwg.mxu0
    %v917 = vunpack.c.l.b16 %v860
    %v918 = vunpack.c.l.b16 %v861
    %v919 = vpack.c.b16 %v918, %v917
    %v921 = vsel %vm99, %v919, 0
    %923 = vmatprep.subr.bf16.mxu0 0
    %924 = vmatpush1.bf16.msra.mxu0 %v862
    %925 = vmatprep.subr.bf16.mxu0 0
    %926 = vmatpush1.bf16.msra.mxu0 0
    %927 = vmatprep.subr.bf16.mxu0 0
    %928 = vmatpush1.bf16.msra.mxu0 0
    %929 = vmatprep.subr.bf16.mxu0 0
    %930 = vmatpush1.bf16.msra.mxu0 0
    %931 = vmatprep.subr.bf16.mxu0 0
    %932 = vmatpush1.bf16.msra.mxu0 0
    %933 = vmatprep.subr.bf16.mxu0 0
    %934 = vmatpush1.bf16.msra.mxu0 0
    %935 = vmatprep.subr.bf16.mxu0 0
    %936 = vmatpush1.bf16.msra.mxu0 0
    %937 = vmatprep.subr.bf16.mxu0 0
    %938 = vmatpush1.bf16.msra.mxu0 0
    %939 = vmatprep.subr.bf16.mxu0 0
    %940 = vmatpush1.bf16.msra.mxu0 0
    %941 = vmatprep.subr.bf16.mxu0 0
    %942 = vmatpush1.bf16.msra.mxu0 0
    %943 = vmatprep.subr.bf16.mxu0 0
    %944 = vmatpush1.bf16.msra.mxu0 0
    %945 = vmatprep.subr.bf16.mxu0 0
    %946 = vmatpush1.bf16.msra.mxu0 0
    %947 = vmatprep.subr.bf16.mxu0 0
    %948 = vmatpush1.bf16.msra.mxu0 0
    %949 = vmatprep.subr.bf16.mxu0 0
    %950 = vmatpush1.bf16.msra.mxu0 0
    %951 = vmatprep.subr.bf16.mxu0 0
    %952 = vmatpush1.bf16.msra.mxu0 0
    %953 = vmatprep.subr.bf16.mxu0 0
    %954 = vmatpush1.bf16.msra.mxu0 0
    %955 = vmatprep.mubr.bf16.mxu0 0
    %956 = vmatmul.mubr.bf16.gmra.mrb[0].mxu0 %v921
    %v957 = vpop.f32.mrb[0].mxu0
    %v958 = vadd.f32 %v909, %v957
    %v959 = vpop.f32.mrb[0].mxu0
    %v960 = vpop.f32.mrb[0].mxu0
    %v961 = vadd.f32 %v912, %v960
    %v962 = vpop.f32.mrb[0].mxu0
    %963 = vdwg.mxu0
    %v964 = vld [vmem:[%s6] sm:$0xff]
    %v965 = vld [vmem:[%s6 + $0x8] sm:$0xff]
    %967 = vset.pattern.permute.xlu0 0
    %968 = vperm.xlu0 %967, %v964
    %v969 = vpop.permute.xlu0 %968
    %972 = vset.pattern.permute.xlu0 0
    %973 = vperm.xlu0 %972, %v965
    %v974 = vpop.permute.xlu0 %973
    %v976 = vadd.f32 %v958, %v969
    %v977 = vadd.f32 %v961, %v974
    %vm978 = vcmp.gt.f32.partialorder %v976, 0.0
    %vm979 = vcmp.gt.f32.partialorder %v977, 0.0
    %v980 = vstv %s715
    %v981 = vmul.f32 %v980, %v976
    %v982 = vmul.f32 %v980, %v977
    %v983 = vsel %vm978, %v976, %v981
    %v984 = vsel %vm979, %v977, %v982
    %v985 = vld [vmem:[%s7] sm:$0xf]
    %v986 = vld [vmem:[%s7 + $0x4] sm:$0xf]
    %v987 = vld [vmem:[#allocation2] sm:$0xff]
    %v988 = vld [vmem:[#allocation2 + $0x8] sm:$0xff]
    %v989 = vpack.c.bf16 %v988, %v987
    %v990 = vld [vmem:[%s8] sm:$0xff]
    %v991 = vld [vmem:[%s8 + $0x8] sm:$0xff]
    %993 = vset.pattern.permute.xlu0 0
    %994 = vperm.xlu0 %993, %v990
    %v995 = vpop.permute.xlu0 %994
    %998 = vset.pattern.permute.xlu0 0
    %999 = vperm.xlu0 %998, %v991
    %v1000 = vpop.permute.xlu0 %999
    %v1004 = vunpack.c.l.b16 %v985
    %v1005 = vunpack.c.l.b16 %v986
    %v1006 = vpack.c.b16 %v1005, %v1004
    %v1008 = vsel %vm99, %v1006, 0
    %1010 = vmatprep.subr.bf16.mxu0 0
    %1011 = vmatpush1.bf16.msra.mxu0 %v989
    %1012 = vmatprep.subr.bf16.mxu0 0
    %1013 = vmatpush1.bf16.msra.mxu0 0
    %1014 = vmatprep.subr.bf16.mxu0 0
    %1015 = vmatpush1.bf16.msra.mxu0 0
    %1016 = vmatprep.subr.bf16.mxu0 0
    %1017 = vmatpush1.bf16.msra.mxu0 0
    %1018 = vmatprep.subr.bf16.mxu0 0
    %1019 = vmatpush1.bf16.msra.mxu0 0
    %1020 = vmatprep.subr.bf16.mxu0 0
    %1021 = vmatpush1.bf16.msra.mxu0 0
    %1022 = vmatprep.subr.bf16.mxu0 0
    %1023 = vmatpush1.bf16.msra.mxu0 0
    %1024 = vmatprep.subr.bf16.mxu0 0
    %1025 = vmatpush1.bf16.msra.mxu0 0
    %1026 = vmatprep.subr.bf16.mxu0 0
    %1027 = vmatpush1.bf16.msra.mxu0 0
    %1028 = vmatprep.subr.bf16.mxu0 0
    %1029 = vmatpush1.bf16.msra.mxu0 0
    %1030 = vmatprep.subr.bf16.mxu0 0
    %1031 = vmatpush1.bf16.msra.mxu0 0
    %1032 = vmatprep.subr.bf16.mxu0 0
    %1033 = vmatpush1.bf16.msra.mxu0 0
    %1034 = vmatprep.subr.bf16.mxu0 0
    %1035 = vmatpush1.bf16.msra.mxu0 0
    %1036 = vmatprep.subr.bf16.mxu0 0
    %1037 = vmatpush1.bf16.msra.mxu0 0
    %1038 = vmatprep.subr.bf16.mxu0 0
    %1039 = vmatpush1.bf16.msra.mxu0 0
    %1040 = vmatprep.subr.bf16.mxu0 0
    %1041 = vmatpush1.bf16.msra.mxu0 0
    %1042 = vmatprep.mubr.bf16.mxu0 0
    %1043 = vmatmul.mubr.bf16.gmra.mrb[0].mxu0 %v1008
    %v1044 = vpop.f32.mrb[0].mxu0
    %v1045 = vadd.f32 %v995, %v1044
    %v1046 = vpop.f32.mrb[0].mxu0
    %v1047 = vpop.f32.mrb[0].mxu0
    %v1048 = vadd.f32 %v1000, %v1047
    %v1049 = vpop.f32.mrb[0].mxu0
    %1050 = vdwg.mxu0
    %v1051 = vadd.f32 %v983, %v1045
    %v1052 = vadd.f32 %v984, %v1048
    %vm1053 = vcmp.gt.f32.partialorder %v1051, 0.0
    %vm1054 = vcmp.gt.f32.partialorder %v1052, 0.0
    %v1055 = vstv %s716
    %v1056 = vmul.f32 %v1055, %v1051
    %v1057 = vmul.f32 %v1055, %v1052
    %v1058 = vsel %vm1053, %v1051, %v1056
    %v1059 = vsel %vm1054, %v1052, %v1057
    %1060 = vst [vmem:[#allocation2] sm:$0xff] %v1058
    %1061 = vst [vmem:[#allocation2 + $0x8] sm:$0xff] %v1059
    %s1062 = sld [smem:[#allocation4 + $0x3]]
    %s1063 = sld [smem:[#allocation4 + $0x4]]
    %s1064 = sld [smem:[#allocation4 + $0x5]]
    %v1065 = vld [vmem:[#allocation2] sm:$0xff]
    %v1066 = vld [vmem:[#allocation2 + $0x8] sm:$0xff]
    %1067 = vrot.lane.b32.xlu0 %v1065, 2
    %v1068 = vpop.permute.xlu0 %1067
    %1069 = vrot.lane.b32.xlu0 %v1066, 2
    %v1070 = vpop.permute.xlu0 %1069
    %v1071 = vsel %vm433, %v1068, 0.0
    %v1072 = vsel %vm433, %v1070, 0.0
    %v1073 = vpack.c.bf16 %v1072, %v1071
    %1074 = vst [vmem:[#allocation3] sm:$0xff] %v1073
    %v1075 = vld [vmem:[%s9] sm:$0xf]
    %v1076 = vld [vmem:[%s9 + $0x4] sm:$0xf]
    %v1077 = vld [vmem:[#allocation3] sm:$0xff]
    %v1078 = vld [vmem:[%s10] sm:$0xf]
    %v1079 = vld [vmem:[%s10 + $0x4] sm:$0xf]
    %v1080 = vpack.c.bf16 %v1066, %v1065
    %v1083 = vunpack.c.l.b16 %v1078
    %v1084 = vunpack.c.l.b16 %v1079
    %v1085 = vpack.c.b16 %v1084, %v1083
    %v1087 = vsel %vm99, %v1085, 0
    %1089 = vmatprep.subr.bf16.mxu0 0
    %1090 = vmatpush1.bf16.msra.mxu0 %v1080
    %1091 = vmatprep.subr.bf16.mxu0 0
    %1092 = vmatpush1.bf16.msra.mxu0 0
    %1093 = vmatprep.subr.bf16.mxu0 0
    %1094 = vmatpush1.bf16.msra.mxu0 0
    %1095 = vmatprep.subr.bf16.mxu0 0
    %1096 = vmatpush1.bf16.msra.mxu0 0
    %1097 = vmatprep.subr.bf16.mxu0 0
    %1098 = vmatpush1.bf16.msra.mxu0 0
    %1099 = vmatprep.subr.bf16.mxu0 0
    %1100 = vmatpush1.bf16.msra.mxu0 0
    %1101 = vmatprep.subr.bf16.mxu0 0
    %1102 = vmatpush1.bf16.msra.mxu0 0
    %1103 = vmatprep.subr.bf16.mxu0 0
    %1104 = vmatpush1.bf16.msra.mxu0 0
    %1105 = vmatprep.subr.bf16.mxu0 0
    %1106 = vmatpush1.bf16.msra.mxu0 0
    %1107 = vmatprep.subr.bf16.mxu0 0
    %1108 = vmatpush1.bf16.msra.mxu0 0
    %1109 = vmatprep.subr.bf16.mxu0 0
    %1110 = vmatpush1.bf16.msra.mxu0 0
    %1111 = vmatprep.subr.bf16.mxu0 0
    %1112 = vmatpush1.bf16.msra.mxu0 0
    %1113 = vmatprep.subr.bf16.mxu0 0
    %1114 = vmatpush1.bf16.msra.mxu0 0
    %1115 = vmatprep.subr.bf16.mxu0 0
    %1116 = vmatpush1.bf16.msra.mxu0 0
    %1117 = vmatprep.subr.bf16.mxu0 0
    %1118 = vmatpush1.bf16.msra.mxu0 0
    %1119 = vmatprep.subr.bf16.mxu0 0
    %1120 = vmatpush1.bf16.msra.mxu0 0
    %1121 = vmatprep.mubr.bf16.mxu0 0
    %1122 = vmatmul.mubr.bf16.gmra.mrb[0].mxu0 %v1087
    %v1123 = vpop.f32.mrb[0].mxu0
    %v1124 = vadd.f32 0.0, %v1123
    %v1125 = vpop.f32.mrb[0].mxu0
    %v1126 = vpop.f32.mrb[0].mxu0
    %v1127 = vadd.f32 0.0, %v1126
    %v1128 = vpop.f32.mrb[0].mxu0
    %1129 = vdwg.mxu0
    %v1132 = vunpack.c.l.b16 %v1075
    %v1133 = vunpack.c.l.b16 %v1076
    %v1134 = vpack.c.b16 %v1133, %v1132
    %v1136 = vsel %vm99, %v1134, 0
    %1138 = vmatprep.subr.bf16.mxu0 0
    %1139 = vmatpush1.bf16.msra.mxu0 %v1077
    %1140 = vmatprep.subr.bf16.mxu0 0
    %1141 = vmatpush1.bf16.msra.mxu0 0
    %1142 = vmatprep.subr.bf16.mxu0 0
    %1143 = vmatpush1.bf16.msra.mxu0 0
    %1144 = vmatprep.subr.bf16.mxu0 0
    %1145 = vmatpush1.bf16.msra.mxu0 0
    %1146 = vmatprep.subr.bf16.mxu0 0
    %1147 = vmatpush1.bf16.msra.mxu0 0
    %1148 = vmatprep.subr.bf16.mxu0 0
    %1149 = vmatpush1.bf16.msra.mxu0 0
    %1150 = vmatprep.subr.bf16.mxu0 0
    %1151 = vmatpush1.bf16.msra.mxu0 0
    %1152 = vmatprep.subr.bf16.mxu0 0
    %1153 = vmatpush1.bf16.msra.mxu0 0
    %1154 = vmatprep.subr.bf16.mxu0 0
    %1155 = vmatpush1.bf16.msra.mxu0 0
    %1156 = vmatprep.subr.bf16.mxu0 0
    %1157 = vmatpush1.bf16.msra.mxu0 0
    %1158 = vmatprep.subr.bf16.mxu0 0
    %1159 = vmatpush1.bf16.msra.mxu0 0
    %1160 = vmatprep.subr.bf16.mxu0 0
    %1161 = vmatpush1.bf16.msra.mxu0 0
    %1162 = vmatprep.subr.bf16.mxu0 0
    %1163 = vmatpush1.bf16.msra.mxu0 0
    %1164 = vmatprep.subr.bf16.mxu0 0
    %1165 = vmatpush1.bf16.msra.mxu0 0
    %1166 = vmatprep.subr.bf16.mxu0 0
    %1167 = vmatpush1.bf16.msra.mxu0 0
    %1168 = vmatprep.subr.bf16.mxu0 0
    %1169 = vmatpush1.bf16.msra.mxu0 0
    %1170 = vmatprep.mubr.bf16.mxu0 0
    %1171 = vmatmul.mubr.bf16.gmra.mrb[0].mxu0 %v1136
    %v1172 = vpop.f32.mrb[0].mxu0
    %v1173 = vadd.f32 %v1124, %v1172
    %v1174 = vpop.f32.mrb[0].mxu0
    %v1175 = vpop.f32.mrb[0].mxu0
    %v1176 = vadd.f32 %v1127, %v1175
    %v1177 = vpop.f32.mrb[0].mxu0
    %1178 = vdwg.mxu0
    %v1179 = vld [vmem:[%s11] sm:$0xff]
    %v1180 = vld [vmem:[%s11 + $0x8] sm:$0xff]
    %1182 = vset.pattern.permute.xlu0 0
    %1183 = vperm.xlu0 %1182, %v1179
    %v1184 = vpop.permute.xlu0 %1183
    %1187 = vset.pattern.permute.xlu0 0
    %1188 = vperm.xlu0 %1187, %v1180
    %v1189 = vpop.permute.xlu0 %1188
    %v1191 = vadd.f32 %v1173, %v1184
    %v1192 = vadd.f32 %v1176, %v1189
    %vm1193 = vcmp.gt.f32.partialorder %v1191, 0.0
    %vm1194 = vcmp.gt.f32.partialorder %v1192, 0.0
    %v1195 = vstv %s1062
    %v1196 = vmul.f32 %v1195, %v1191
    %v1197 = vmul.f32 %v1195, %v1192
    %v1198 = vsel %vm1193, %v1191, %v1196
    %v1199 = vsel %vm1194, %v1192, %v1197
    %1200 = vrot.lane.b32.xlu0 %v1198, 2
    %v1201 = vpop.permute.xlu0 %1200
    %1202 = vrot.lane.b32.xlu0 %v1199, 2
    %v1203 = vpop.permute.xlu0 %1202
    %v1204 = vsel %vm433, %v1201, 0.0
    %v1205 = vsel %vm433, %v1203, 0.0
    %v1206 = vpack.c.bf16 %v1205, %v1204
    %1207 = vst [vmem:[#allocation3] sm:$0xff] %v1206
    %v1208 = vld [vmem:[%s12] sm:$0xf]
    %v1209 = vld [vmem:[%s12 + $0x4] sm:$0xf]
    %v1210 = vld [vmem:[#allocation3] sm:$0xff]
    %v1211 = vld [vmem:[%s13] sm:$0xf]
    %v1212 = vld [vmem:[%s13 + $0x4] sm:$0xf]
    %v1213 = vpack.c.bf16 %v1199, %v1198
    %v1216 = vunpack.c.l.b16 %v1211
    %v1217 = vunpack.c.l.b16 %v1212
    %v1218 = vpack.c.b16 %v1217, %v1216
    %v1220 = vsel %vm99, %v1218, 0
    %1222 = vmatprep.subr.bf16.mxu0 0
    %1223 = vmatpush1.bf16.msra.mxu0 %v1213
    %1224 = vmatprep.subr.bf16.mxu0 0
    %1225 = vmatpush1.bf16.msra.mxu0 0
    %1226 = vmatprep.subr.bf16.mxu0 0
    %1227 = vmatpush1.bf16.msra.mxu0 0
    %1228 = vmatprep.subr.bf16.mxu0 0
    %1229 = vmatpush1.bf16.msra.mxu0 0
    %1230 = vmatprep.subr.bf16.mxu0 0
    %1231 = vmatpush1.bf16.msra.mxu0 0
    %1232 = vmatprep.subr.bf16.mxu0 0
    %1233 = vmatpush1.bf16.msra.mxu0 0
    %1234 = vmatprep.subr.bf16.mxu0 0
    %1235 = vmatpush1.bf16.msra.mxu0 0
    %1236 = vmatprep.subr.bf16.mxu0 0
    %1237 = vmatpush1.bf16.msra.mxu0 0
    %1238 = vmatprep.subr.bf16.mxu0 0
    %1239 = vmatpush1.bf16.msra.mxu0 0
    %1240 = vmatprep.subr.bf16.mxu0 0
    %1241 = vmatpush1.bf16.msra.mxu0 0
    %1242 = vmatprep.subr.bf16.mxu0 0
    %1243 = vmatpush1.bf16.msra.mxu0 0
    %1244 = vmatprep.subr.bf16.mxu0 0
    %1245 = vmatpush1.bf16.msra.mxu0 0
    %1246 = vmatprep.subr.bf16.mxu0 0
    %1247 = vmatpush1.bf16.msra.mxu0 0
    %1248 = vmatprep.subr.bf16.mxu0 0
    %1249 = vmatpush1.bf16.msra.mxu0 0
    %1250 = vmatprep.subr.bf16.mxu0 0
    %1251 = vmatpush1.bf16.msra.mxu0 0
    %1252 = vmatprep.subr.bf16.mxu0 0
    %1253 = vmatpush1.bf16.msra.mxu0 0
    %1254 = vmatprep.mubr.bf16.mxu0 0
    %1255 = vmatmul.mubr.bf16.gmra.mrb[0].mxu0 %v1220
    %v1256 = vpop.f32.mrb[0].mxu0
    %v1257 = vadd.f32 0.0, %v1256
    %v1258 = vpop.f32.mrb[0].mxu0
    %v1259 = vpop.f32.mrb[0].mxu0
    %v1260 = vadd.f32 0.0, %v1259
    %v1261 = vpop.f32.mrb[0].mxu0
    %1262 = vdwg.mxu0
    %v1265 = vunpack.c.l.b16 %v1208
    %v1266 = vunpack.c.l.b16 %v1209
    %v1267 = vpack.c.b16 %v1266, %v1265
    %v1269 = vsel %vm99, %v1267, 0
    %1271 = vmatprep.subr.bf16.mxu0 0
    %1272 = vmatpush1.bf16.msra.mxu0 %v1210
    %1273 = vmatprep.subr.bf16.mxu0 0
    %1274 = vmatpush1.bf16.msra.mxu0 0
    %1275 = vmatprep.subr.bf16.mxu0 0
    %1276 = vmatpush1.bf16.msra.mxu0 0
    %1277 = vmatprep.subr.bf16.mxu0 0
    %1278 = vmatpush1.bf16.msra.mxu0 0
    %1279 = vmatprep.subr.bf16.mxu0 0
    %1280 = vmatpush1.bf16.msra.mxu0 0
    %1281 = vmatprep.subr.bf16.mxu0 0
    %1282 = vmatpush1.bf16.msra.mxu0 0
    %1283 = vmatprep.subr.bf16.mxu0 0
    %1284 = vmatpush1.bf16.msra.mxu0 0
    %1285 = vmatprep.subr.bf16.mxu0 0
    %1286 = vmatpush1.bf16.msra.mxu0 0
    %1287 = vmatprep.subr.bf16.mxu0 0
    %1288 = vmatpush1.bf16.msra.mxu0 0
    %1289 = vmatprep.subr.bf16.mxu0 0
    %1290 = vmatpush1.bf16.msra.mxu0 0
    %1291 = vmatprep.subr.bf16.mxu0 0
    %1292 = vmatpush1.bf16.msra.mxu0 0
    %1293 = vmatprep.subr.bf16.mxu0 0
    %1294 = vmatpush1.bf16.msra.mxu0 0
    %1295 = vmatprep.subr.bf16.mxu0 0
    %1296 = vmatpush1.bf16.msra.mxu0 0
    %1297 = vmatprep.subr.bf16.mxu0 0
    %1298 = vmatpush1.bf16.msra.mxu0 0
    %1299 = vmatprep.subr.bf16.mxu0 0
    %1300 = vmatpush1.bf16.msra.mxu0 0
    %1301 = vmatprep.subr.bf16.mxu0 0
    %1302 = vmatpush1.bf16.msra.mxu0 0
    %1303 = vmatprep.mubr.bf16.mxu0 0
    %1304 = vmatmul.mubr.bf16.gmra.mrb[0].mxu0 %v1269
    %v1305 = vpop.f32.mrb[0].mxu0
    %v1306 = vadd.f32 %v1257, %v1305
    %v1307 = vpop.f32.mrb[0].mxu0
    %v1308 = vpop.f32.mrb[0].mxu0
    %v1309 = vadd.f32 %v1260, %v1308
    %v1310 = vpop.f32.mrb[0].mxu0
    %1311 = vdwg.mxu0
    %v1312 = vld [vmem:[%s14] sm:$0xff]
    %v1313 = vld [vmem:[%s14 + $0x8] sm:$0xff]
    %1315 = vset.pattern.permute.xlu0 0
    %1316 = vperm.xlu0 %1315, %v1312
    %v1317 = vpop.permute.xlu0 %1316
    %1320 = vset.pattern.permute.xlu0 0
    %1321 = vperm.xlu0 %1320, %v1313
    %v1322 = vpop.permute.xlu0 %1321
    %v1324 = vadd.f32 %v1306, %v1317
    %v1325 = vadd.f32 %v1309, %v1322
    %vm1326 = vcmp.gt.f32.partialorder %v1324, 0.0
    %vm1327 = vcmp.gt.f32.partialorder %v1325, 0.0
    %v1328 = vstv %s1063
    %v1329 = vmul.f32 %v1328, %v1324
    %v1330 = vmul.f32 %v1328, %v1325
    %v1331 = vsel %vm1326, %v1324, %v1329
    %v1332 = vsel %vm1327, %v1325, %v1330
    %v1333 = vld [vmem:[#allocation2] sm:$0xff]
    %v1334 = vld [vmem:[#allocation2 + $0x8] sm:$0xff]
    %v1335 = vadd.f32 %v1331, %v1333
    %v1336 = vadd.f32 %v1332, %v1334
    %vm1337 = vcmp.gt.f32.partialorder %v1335, 0.0
    %vm1338 = vcmp.gt.f32.partialorder %v1336, 0.0
    %v1339 = vstv %s1064
    %v1340 = vmul.f32 %v1339, %v1335
    %v1341 = vmul.f32 %v1339, %v1336
    %v1342 = vsel %vm1337, %v1335, %v1340
    %v1343 = vsel %vm1338, %v1336, %v1341
    %s1344 = scalar_lea.vmem [#allocation7], 16
    %1345 = vst [vmem:[%s1344] sm:$0xff] %v1342
    %1346 = vst [vmem:[%s1344 + $0x8] sm:$0xff] %v1343
    // Predicated region
    $region70: #{tpu_custom_call.1} parent=1 // pred_check
      _
    $region71: #{tpu_custom_call.1} parent=1 // pred_check_branch
      %1348 = sbr.rel (0) target = $region73
    $region72: #{tpu_custom_call.1} parent=1 // pred_region
      %s1350 = ssub.s32 512, 512
      %1351 = vsyncadd [#allocation5], %s1350
      %s1352 = sshll.u32 [#allocation7], 4
      %s1353 = int_to_ptr.vmem [resolvable:$true] %s1352
      %1358 = dma.vmem_to_hbm [thread:$0]  %s1353, 512, %s16, [#allocation5], 128, 128, 8
    $region73: #{tpu_custom_call.1} parent=1 // pred_fallthru
      _
    // Predicated region
    $region74: #{tpu_custom_call.1} parent=1 // pred_check
      _
    $region75: #{tpu_custom_call.1} parent=1 // pred_check_branch
      %1360 = sbr.rel (0) target = $region77
    $region76: #{tpu_custom_call.1} parent=1 // pred_region
      %1361 = dma.done [#allocation5], 512
    $region77: #{tpu_custom_call.1} parent=1 // pred_fallthru
      _
    %1362 = vsyncpa [#allocation5], 1
    %1363 = vsyncpa [#allocation6], 1

</llo_original>
